<compile_context>
chip_gen: v5e
topology: v5e:2x2
jax: 0.10.0
libtpu: 0.0.40
codegen_flags: <defaults>
</compile_context>

<pallas_src>
import jax
import jax.numpy as jnp
from jax.experimental import pallas as pl
from jax.experimental.pallas import tpu as pltpu


# ----------------------------------------------------------------------------
# Fused CoordAtt kernel (one batch block per grid step, NHWC layout)
# ----------------------------------------------------------------------------
def _coordatt_kernel(x_ref, w1_ref, b1_ref, wh_ref, bh_ref, ww_ref, bw_ref,
                     o_ref, xh_ref):
    B, H, W, C = x_ref.shape
    inv_w = 1.0 / float(W)
    inv_h = 1.0 / float(H)

    # --- single-pass directional pooling (one sweep over the slab) ----------
    xw_sum = jnp.zeros((B, W, C), jnp.float32)
    for h in range(H):
        row = x_ref[:, h, :, :].astype(jnp.float32)        # (B, W, C)
        xh_ref[:, h, :] = jnp.sum(row, axis=1) * inv_w     # mean over W
        xw_sum = xw_sum + row                              # running sum over H
    x_h = xh_ref[...]                                      # (B, H, C)
    x_w = xw_sum * inv_h                                   # (B, W, C)

    w1 = w1_ref[...]                                       # (C, mip), BN-folded
    b1 = b1_ref[...]                                       # (1, mip)

    def squeeze(v):            # 1x1 conv + folded BN + h_swish on rows of C
        t = jnp.dot(v, w1, preferred_element_type=jnp.float32) + b1
        return t * (jnp.clip(t + 3.0, 0.0, 6.0) * (1.0 / 6.0))

    def gate(y, w_ref2, b_ref2):   # 1x1 conv + sigmoid (tanh identity -> EUP)
        t = jnp.dot(y, w_ref2[...], preferred_element_type=jnp.float32)
        t = t + b_ref2[...]
        return 0.5 * jnp.tanh(0.5 * t) + 0.5

    a_h = gate(squeeze(x_h.reshape(B * H, C)), wh_ref, bh_ref).reshape(B, H, C)
    a_w = gate(squeeze(x_w.reshape(B * W, C)), ww_ref, bw_ref).reshape(B, W, C)

    # --- apply: out = x * a_h (bcast over W) * a_w (bcast over H) -----------
    for b in range(B):
        gated = (x_ref[b].astype(jnp.float32)
                 * a_h[b][:, None, :]
                 * a_w[b][None, :, :])
        o_ref[b] = gated.astype(o_ref.dtype)


# ----------------------------------------------------------------------------
# Wrapper: batch blocking, VMEM budgeting, BlockSpecs
# ----------------------------------------------------------------------------
def _round_up(x, m):
    return ((x + m - 1) // m) * m


def _choose_batch_block(n, h, w, c, dtype, target_bytes=1 << 20):
    """Largest batch block giving ~target-sized DMA tiles, >=2 grid steps."""
    per_sample = h * _round_up(w, 8) * _round_up(c, 128) * jnp.dtype(dtype).itemsize
    bb = int(max(1, min(n, target_bytes // max(per_sample, 1))))
    while bb > 1 and -(-n // bb) < 2:      # keep both TensorCores busy (v7x)
        bb -= 1
    while n % bb:                          # avoid ragged batch blocks
        bb -= 1
    return bb


def coord_att_forward(params, x, *, batch_block=None):
    """Fused CoordAtt forward. x: (N, H, W, C) NHWC; returns NHWC, same dtype."""
    N, H, W, C = x.shape
    mip = params["w1"].shape[1]
    bb = _choose_batch_block(N, H, W, C, x.dtype) if batch_block is None else batch_block
    assert N % bb == 0, (N, bb)

    itemsize = jnp.dtype(x.dtype).itemsize
    blk_bytes = bb * H * _round_up(W, 8) * _round_up(C, 128) * itemsize
    # in + out blocks, double buffered, plus weights/scratch headroom.
    vmem_limit = int(min(max(4 * blk_bytes + (4 << 20), 32 << 20), 64 << 20))

    xmap = lambda n: (n, 0, 0, 0)
    wmap = lambda n: (0, 0)

    return pl.pallas_call(
        _coordatt_kernel,
        out_shape=jax.ShapeDtypeStruct((N, H, W, C), x.dtype),
        grid_spec=pltpu.PrefetchScalarGridSpec(
            num_scalar_prefetch=0,
            grid=(N // bb,),
            in_specs=[
                pl.BlockSpec((bb, H, W, C), xmap),     # x (NHWC)
                pl.BlockSpec((C, mip), wmap),          # conv1 weight (BN folded)
                pl.BlockSpec((1, mip), wmap),          # conv1 + BN bias
                pl.BlockSpec((mip, C), wmap),          # conv_h weight
                pl.BlockSpec((1, C), wmap),            # conv_h bias
                pl.BlockSpec((mip, C), wmap),          # conv_w weight
                pl.BlockSpec((1, C), wmap),            # conv_w bias
            ],
            out_specs=pl.BlockSpec((bb, H, W, C), xmap),
            scratch_shapes=[pltpu.VMEM((bb, H, C), jnp.float32)],   # x_h pool
        ),
        compiler_params=pltpu.CompilerParams(
            dimension_semantics=("parallel",),
            vmem_limit_bytes=vmem_limit),
    )(x, params["w1"], params["b1"], params["wh"], params["bh"],
      params["ww"], params["bw"])


def coord_att_forward_nchw(params, x_nchw, **kw):
    """PyTorch-layout convenience wrapper.  NOTE: these two transposes are
    extra full HBM passes; prefer keeping activations NHWC end-to-end and
    calling coord_att_forward directly (review feedback #1)."""
    out = coord_att_forward(params, jnp.transpose(x_nchw, (0, 2, 3, 1)), **kw)
    return jnp.transpose(out, (0, 3, 1, 2))


# ----------------------------------------------------------------------------
# Deterministic parameters (packed for the kernel + raw for the reference)
# ----------------------------------------------------------------------------
def build_params(key, inp, oup, reduction=32):
    mip = max(8, inp // reduction)
    eps = 1e-5
    ks = jax.random.split(key, 10)
    conv1_w = jax.random.normal(ks[0], (mip, inp), jnp.float32) / jnp.sqrt(float(inp))
    conv1_b = 0.1 * jax.random.normal(ks[1], (mip,), jnp.float32)
    gamma = 1.0 + 0.1 * jax.random.normal(ks[2], (mip,), jnp.float32)
    beta = 0.1 * jax.random.normal(ks[3], (mip,), jnp.float32)
    rmean = 0.1 * jax.random.normal(ks[4], (mip,), jnp.float32)
    rvar = 1.0 + 0.1 * jax.random.uniform(ks[5], (mip,), jnp.float32)
    convh_w = jax.random.normal(ks[6], (oup, mip), jnp.float32) / jnp.sqrt(float(mip))
    convh_b = 0.1 * jax.random.normal(ks[7], (oup,), jnp.float32)
    convw_w = jax.random.normal(ks[8], (oup, mip), jnp.float32) / jnp.sqrt(float(mip))
    convw_b = 0.1 * jax.random.normal(ks[9], (oup,), jnp.float32)

    raw = dict(conv1_w=conv1_w, conv1_b=conv1_b, bn_gamma=gamma, bn_beta=beta,
               bn_mean=rmean, bn_var=rvar, convh_w=convh_w, convh_b=convh_b,
               convw_w=convw_w, convw_b=convw_b)

    # Pack once at build time: transpose to (Cin, Cout) and fold conv1 bias +
    # BatchNorm scale/shift directly into conv1's weight/bias.
    s1 = gamma / jnp.sqrt(rvar + eps)                      # (mip,)
    packed = dict(
        w1=jnp.transpose(conv1_w) * s1[None, :],           # (inp, mip)
        b1=(beta + (conv1_b - rmean) * s1).reshape(1, mip),
        wh=jnp.transpose(convh_w),                          # (mip, oup)
        bh=convh_b.reshape(1, oup),
        ww=jnp.transpose(convw_w),                          # (mip, oup)
        bw=convw_b.reshape(1, oup),
    )
    return packed, raw


# ----------------------------------------------------------------------------
# Plain-JAX reference mirroring the PyTorch CoordAtt graph (NCHW)
# ----------------------------------------------------------------------------
def coord_att_reference(raw, x):
    eps = 1e-5
    n, c, h, w = x.shape
    x_h = jnp.mean(x, axis=3, keepdims=True)                          # (n,c,h,1)
    x_w = jnp.transpose(jnp.mean(x, axis=2, keepdims=True), (0, 1, 3, 2))
    y = jnp.concatenate([x_h, x_w], axis=2)                           # (n,c,h+w,1)
    y = jnp.einsum("nchw,mc->nmhw", y, raw["conv1_w"]) \
        + raw["conv1_b"][None, :, None, None]
    scale = raw["bn_gamma"] / jnp.sqrt(raw["bn_var"] + eps)
    y = (y - raw["bn_mean"][None, :, None, None]) * scale[None, :, None, None] \
        + raw["bn_beta"][None, :, None, None]
    y = y * jnp.clip(y + 3.0, 0.0, 6.0) / 6.0                         # h_swish
    y_h, y_w = y[:, :, :h, :], y[:, :, h:, :]
    y_w = jnp.transpose(y_w, (0, 1, 3, 2))
    a_h = jax.nn.sigmoid(jnp.einsum("nchw,oc->nohw", y_h, raw["convh_w"])
                         + raw["convh_b"][None, :, None, None])
    a_w = jax.nn.sigmoid(jnp.einsum("nchw,oc->nohw", y_w, raw["convw_w"])
                         + raw["convw_b"][None, :, None, None])
    return x * a_w * a_h


if __name__ == "__main__":
    INP = OUP = 128      # reduction=32 -> mip = max(8, 128//32) = 8; C lane-dense
    N, H, W = 2, 16, 16

    key = jax.random.PRNGKey(0)
    pkey, xkey = jax.random.split(key)
    packed, raw = build_params(pkey, INP, OUP)

    # Activations stay NHWC end-to-end: no relayouts around the kernel.
    x = jax.random.normal(xkey, (N, H, W, INP), jnp.float32)

    fwd = jax.jit(coord_att_forward)
    out = jax.block_until_ready(fwd(packed, x))
    assert out.shape == (N, H, W, OUP), out.shape
    assert bool(jnp.all(jnp.isfinite(out)))

    # Validate against a plain-JAX mirror of the PyTorch (NCHW) graph.
    ref_nchw = coord_att_reference(raw, jnp.transpose(x, (0, 3, 1, 2)))
    ref = jnp.transpose(ref_nchw, (0, 2, 3, 1))
    max_err = float(jnp.max(jnp.abs(out - ref)))
    assert max_err < 1e-2, f"max |err| = {max_err}"

    # bf16 I/O variant (halves HBM bytes on v6e/v7x); arithmetic stays f32.
    out_bf16 = jax.block_until_ready(
        jax.jit(coord_att_forward)(packed, x.astype(jnp.bfloat16)))
    assert out_bf16.shape == (N, H, W, OUP)
    assert bool(jnp.all(jnp.isfinite(out_bf16.astype(jnp.float32))))

    print("KERNEL_OK")
</pallas_src>

<mosaic_0001>
module attributes {stable_mosaic.version = 11 : i64} {
  func.func @_coordatt_kernel(%arg0: i32, %arg1: memref<1x16x16x128xf32, #tpu.memory_space<vmem>>, %arg2: memref<128x8xf32, #tpu.memory_space<vmem>>, %arg3: memref<1x8xf32, #tpu.memory_space<vmem>>, %arg4: memref<8x128xf32, #tpu.memory_space<vmem>>, %arg5: memref<1x128xf32, #tpu.memory_space<vmem>>, %arg6: memref<8x128xf32, #tpu.memory_space<vmem>>, %arg7: memref<1x128xf32, #tpu.memory_space<vmem>>, %arg8: memref<1x16x16x128xf32, #tpu.memory_space<vmem>>, %arg9: memref<1x16x128xf32, #tpu.memory_space<vmem>>) attributes {dimension_semantics = [#tpu.dimension_semantics<parallel>], iteration_bounds = array<i64: 2>, scalar_prefetch = 0 : i64, scratch_operands = 1 : i64, tpu.core_type = #tpu.core_type<tc>, window_params = [{transform_indices = @transform_0, window_bounds = array<i64: 1, 16, 16, 128>}, {pipeline_mode = #tpu.pipeline_mode<synchronous>, transform_indices = @transform_1, window_bounds = array<i64: 128, 8>}, {pipeline_mode = #tpu.pipeline_mode<synchronous>, transform_indices = @transform_2, window_bounds = array<i64: 1, 8>}, {pipeline_mode = #tpu.pipeline_mode<synchronous>, transform_indices = @transform_3, window_bounds = array<i64: 8, 128>}, {pipeline_mode = #tpu.pipeline_mode<synchronous>, transform_indices = @transform_4, window_bounds = array<i64: 1, 128>}, {pipeline_mode = #tpu.pipeline_mode<synchronous>, transform_indices = @transform_5, window_bounds = array<i64: 8, 128>}, {pipeline_mode = #tpu.pipeline_mode<synchronous>, transform_indices = @transform_6, window_bounds = array<i64: 1, 128>}, {transform_indices = @transform_7, window_bounds = array<i64: 1, 16, 16, 128>}]} {
    %cst = arith.constant 0.000000e+00 : f32
    %0 = vector.broadcast %cst : f32 to vector<1x16x128xf32>
    %c0 = arith.constant 0 : index
    %c0_0 = arith.constant 0 : index
    %c0_1 = arith.constant 0 : index
    %c0_2 = arith.constant 0 : index
    %1 = vector.load %arg1[%c0, %c0_0, %c0_1, %c0_2] : memref<1x16x16x128xf32, #tpu.memory_space<vmem>>, vector<1x1x16x128xf32>
    %2 = vector.shape_cast %1 : vector<1x1x16x128xf32> to vector<1x16x128xf32>
    %cst_3 = arith.constant dense<0.000000e+00> : vector<1x128xf32>
    %3 = vector.multi_reduction <add>, %2, %cst_3 [1] : vector<1x16x128xf32> to vector<1x128xf32>
    %cst_4 = arith.constant 6.250000e-02 : f32
    %4 = vector.broadcast %cst_4 : f32 to vector<1x128xf32>
    %5 = arith.mulf %3, %4 : vector<1x128xf32>
    %c0_5 = arith.constant 0 : index
    %c0_6 = arith.constant 0 : index
    %c0_7 = arith.constant 0 : index
    %6 = vector.load %arg9[%c0_5, %c0_6, %c0_7] : memref<1x16x128xf32, #tpu.memory_space<vmem>>, vector<1x1x128xf32>
    %7 = vector.shape_cast %6 : vector<1x1x128xf32> to vector<1x128xf32>
    %8 = vector.shape_cast %5 : vector<1x128xf32> to vector<1x1x128xf32>
    tpu.vector_store %arg9[%c0_5, %c0_6, %c0_7], %8 {strides = array<i32>} : memref<1x16x128xf32, #tpu.memory_space<vmem>>, vector<1x1x128xf32>,
    %9 = arith.addf %0, %2 : vector<1x16x128xf32>
    %c0_8 = arith.constant 0 : index
    %c1 = arith.constant 1 : index
    %c0_9 = arith.constant 0 : index
    %c0_10 = arith.constant 0 : index
    %10 = vector.load %arg1[%c0_8, %c1, %c0_9, %c0_10] : memref<1x16x16x128xf32, #tpu.memory_space<vmem>>, vector<1x1x16x128xf32>
    %11 = vector.shape_cast %10 : vector<1x1x16x128xf32> to vector<1x16x128xf32>
    %cst_11 = arith.constant dense<0.000000e+00> : vector<1x128xf32>
    %12 = vector.multi_reduction <add>, %11, %cst_11 [1] : vector<1x16x128xf32> to vector<1x128xf32>
    %cst_12 = arith.constant 6.250000e-02 : f32
    %13 = vector.broadcast %cst_12 : f32 to vector<1x128xf32>
    %14 = arith.mulf %12, %13 : vector<1x128xf32>
    %c0_13 = arith.constant 0 : index
    %c1_14 = arith.constant 1 : index
    %c0_15 = arith.constant 0 : index
    %15 = vector.load %arg9[%c0_13, %c1_14, %c0_15] : memref<1x16x128xf32, #tpu.memory_space<vmem>>, vector<1x1x128xf32>
    %16 = vector.shape_cast %15 : vector<1x1x128xf32> to vector<1x128xf32>
    %17 = vector.shape_cast %14 : vector<1x128xf32> to vector<1x1x128xf32>
    tpu.vector_store %arg9[%c0_13, %c1_14, %c0_15], %17 {strides = array<i32>} : memref<1x16x128xf32, #tpu.memory_space<vmem>>, vector<1x1x128xf32>,
    %18 = arith.addf %9, %11 : vector<1x16x128xf32>
    %c0_16 = arith.constant 0 : index
    %c2 = arith.constant 2 : index
    %c0_17 = arith.constant 0 : index
    %c0_18 = arith.constant 0 : index
    %19 = vector.load %arg1[%c0_16, %c2, %c0_17, %c0_18] : memref<1x16x16x128xf32, #tpu.memory_space<vmem>>, vector<1x1x16x128xf32>
    %20 = vector.shape_cast %19 : vector<1x1x16x128xf32> to vector<1x16x128xf32>
    %cst_19 = arith.constant dense<0.000000e+00> : vector<1x128xf32>
    %21 = vector.multi_reduction <add>, %20, %cst_19 [1] : vector<1x16x128xf32> to vector<1x128xf32>
    %cst_20 = arith.constant 6.250000e-02 : f32
    %22 = vector.broadcast %cst_20 : f32 to vector<1x128xf32>
    %23 = arith.mulf %21, %22 : vector<1x128xf32>
    %c0_21 = arith.constant 0 : index
    %c2_22 = arith.constant 2 : index
    %c0_23 = arith.constant 0 : index
    %24 = vector.load %arg9[%c0_21, %c2_22, %c0_23] : memref<1x16x128xf32, #tpu.memory_space<vmem>>, vector<1x1x128xf32>
    %25 = vector.shape_cast %24 : vector<1x1x128xf32> to vector<1x128xf32>
    %26 = vector.shape_cast %23 : vector<1x128xf32> to vector<1x1x128xf32>
    tpu.vector_store %arg9[%c0_21, %c2_22, %c0_23], %26 {strides = array<i32>} : memref<1x16x128xf32, #tpu.memory_space<vmem>>, vector<1x1x128xf32>,
    %27 = arith.addf %18, %20 : vector<1x16x128xf32>
    %c0_24 = arith.constant 0 : index
    %c3 = arith.constant 3 : index
    %c0_25 = arith.constant 0 : index
    %c0_26 = arith.constant 0 : index
    %28 = vector.load %arg1[%c0_24, %c3, %c0_25, %c0_26] : memref<1x16x16x128xf32, #tpu.memory_space<vmem>>, vector<1x1x16x128xf32>
    %29 = vector.shape_cast %28 : vector<1x1x16x128xf32> to vector<1x16x128xf32>
    %cst_27 = arith.constant dense<0.000000e+00> : vector<1x128xf32>
    %30 = vector.multi_reduction <add>, %29, %cst_27 [1] : vector<1x16x128xf32> to vector<1x128xf32>
    %cst_28 = arith.constant 6.250000e-02 : f32
    %31 = vector.broadcast %cst_28 : f32 to vector<1x128xf32>
    %32 = arith.mulf %30, %31 : vector<1x128xf32>
    %c0_29 = arith.constant 0 : index
    %c3_30 = arith.constant 3 : index
    %c0_31 = arith.constant 0 : index
    %33 = vector.load %arg9[%c0_29, %c3_30, %c0_31] : memref<1x16x128xf32, #tpu.memory_space<vmem>>, vector<1x1x128xf32>
    %34 = vector.shape_cast %33 : vector<1x1x128xf32> to vector<1x128xf32>
    %35 = vector.shape_cast %32 : vector<1x128xf32> to vector<1x1x128xf32>
    tpu.vector_store %arg9[%c0_29, %c3_30, %c0_31], %35 {strides = array<i32>} : memref<1x16x128xf32, #tpu.memory_space<vmem>>, vector<1x1x128xf32>,
    %36 = arith.addf %27, %29 : vector<1x16x128xf32>
    %c0_32 = arith.constant 0 : index
    %c4 = arith.constant 4 : index
    %c0_33 = arith.constant 0 : index
    %c0_34 = arith.constant 0 : index
    %37 = vector.load %arg1[%c0_32, %c4, %c0_33, %c0_34] : memref<1x16x16x128xf32, #tpu.memory_space<vmem>>, vector<1x1x16x128xf32>
    %38 = vector.shape_cast %37 : vector<1x1x16x128xf32> to vector<1x16x128xf32>
    %cst_35 = arith.constant dense<0.000000e+00> : vector<1x128xf32>
    %39 = vector.multi_reduction <add>, %38, %cst_35 [1] : vector<1x16x128xf32> to vector<1x128xf32>
    %cst_36 = arith.constant 6.250000e-02 : f32
    %40 = vector.broadcast %cst_36 : f32 to vector<1x128xf32>
    %41 = arith.mulf %39, %40 : vector<1x128xf32>
    %c0_37 = arith.constant 0 : index
    %c4_38 = arith.constant 4 : index
    %c0_39 = arith.constant 0 : index
    %42 = vector.load %arg9[%c0_37, %c4_38, %c0_39] : memref<1x16x128xf32, #tpu.memory_space<vmem>>, vector<1x1x128xf32>
    %43 = vector.shape_cast %42 : vector<1x1x128xf32> to vector<1x128xf32>
    %44 = vector.shape_cast %41 : vector<1x128xf32> to vector<1x1x128xf32>
    tpu.vector_store %arg9[%c0_37, %c4_38, %c0_39], %44 {strides = array<i32>} : memref<1x16x128xf32, #tpu.memory_space<vmem>>, vector<1x1x128xf32>,
    %45 = arith.addf %36, %38 : vector<1x16x128xf32>
    %c0_40 = arith.constant 0 : index
    %c5 = arith.constant 5 : index
    %c0_41 = arith.constant 0 : index
    %c0_42 = arith.constant 0 : index
    %46 = vector.load %arg1[%c0_40, %c5, %c0_41, %c0_42] : memref<1x16x16x128xf32, #tpu.memory_space<vmem>>, vector<1x1x16x128xf32>
    %47 = vector.shape_cast %46 : vector<1x1x16x128xf32> to vector<1x16x128xf32>
    %cst_43 = arith.constant dense<0.000000e+00> : vector<1x128xf32>
    %48 = vector.multi_reduction <add>, %47, %cst_43 [1] : vector<1x16x128xf32> to vector<1x128xf32>
    %cst_44 = arith.constant 6.250000e-02 : f32
    %49 = vector.broadcast %cst_44 : f32 to vector<1x128xf32>
    %50 = arith.mulf %48, %49 : vector<1x128xf32>
    %c0_45 = arith.constant 0 : index
    %c5_46 = arith.constant 5 : index
    %c0_47 = arith.constant 0 : index
    %51 = vector.load %arg9[%c0_45, %c5_46, %c0_47] : memref<1x16x128xf32, #tpu.memory_space<vmem>>, vector<1x1x128xf32>
    %52 = vector.shape_cast %51 : vector<1x1x128xf32> to vector<1x128xf32>
    %53 = vector.shape_cast %50 : vector<1x128xf32> to vector<1x1x128xf32>
    tpu.vector_store %arg9[%c0_45, %c5_46, %c0_47], %53 {strides = array<i32>} : memref<1x16x128xf32, #tpu.memory_space<vmem>>, vector<1x1x128xf32>,
    %54 = arith.addf %45, %47 : vector<1x16x128xf32>
    %c0_48 = arith.constant 0 : index
    %c6 = arith.constant 6 : index
    %c0_49 = arith.constant 0 : index
    %c0_50 = arith.constant 0 : index
    %55 = vector.load %arg1[%c0_48, %c6, %c0_49, %c0_50] : memref<1x16x16x128xf32, #tpu.memory_space<vmem>>, vector<1x1x16x128xf32>
    %56 = vector.shape_cast %55 : vector<1x1x16x128xf32> to vector<1x16x128xf32>
    %cst_51 = arith.constant dense<0.000000e+00> : vector<1x128xf32>
    %57 = vector.multi_reduction <add>, %56, %cst_51 [1] : vector<1x16x128xf32> to vector<1x128xf32>
    %cst_52 = arith.constant 6.250000e-02 : f32
    %58 = vector.broadcast %cst_52 : f32 to vector<1x128xf32>
    %59 = arith.mulf %57, %58 : vector<1x128xf32>
    %c0_53 = arith.constant 0 : index
    %c6_54 = arith.constant 6 : index
    %c0_55 = arith.constant 0 : index
    %60 = vector.load %arg9[%c0_53, %c6_54, %c0_55] : memref<1x16x128xf32, #tpu.memory_space<vmem>>, vector<1x1x128xf32>
    %61 = vector.shape_cast %60 : vector<1x1x128xf32> to vector<1x128xf32>
    %62 = vector.shape_cast %59 : vector<1x128xf32> to vector<1x1x128xf32>
    tpu.vector_store %arg9[%c0_53, %c6_54, %c0_55], %62 {strides = array<i32>} : memref<1x16x128xf32, #tpu.memory_space<vmem>>, vector<1x1x128xf32>,
    %63 = arith.addf %54, %56 : vector<1x16x128xf32>
    %c0_56 = arith.constant 0 : index
    %c7 = arith.constant 7 : index
    %c0_57 = arith.constant 0 : index
    %c0_58 = arith.constant 0 : index
    %64 = vector.load %arg1[%c0_56, %c7, %c0_57, %c0_58] : memref<1x16x16x128xf32, #tpu.memory_space<vmem>>, vector<1x1x16x128xf32>
    %65 = vector.shape_cast %64 : vector<1x1x16x128xf32> to vector<1x16x128xf32>
    %cst_59 = arith.constant dense<0.000000e+00> : vector<1x128xf32>
    %66 = vector.multi_reduction <add>, %65, %cst_59 [1] : vector<1x16x128xf32> to vector<1x128xf32>
    %cst_60 = arith.constant 6.250000e-02 : f32
    %67 = vector.broadcast %cst_60 : f32 to vector<1x128xf32>
    %68 = arith.mulf %66, %67 : vector<1x128xf32>
    %c0_61 = arith.constant 0 : index
    %c7_62 = arith.constant 7 : index
    %c0_63 = arith.constant 0 : index
    %69 = vector.load %arg9[%c0_61, %c7_62, %c0_63] : memref<1x16x128xf32, #tpu.memory_space<vmem>>, vector<1x1x128xf32>
    %70 = vector.shape_cast %69 : vector<1x1x128xf32> to vector<1x128xf32>
    %71 = vector.shape_cast %68 : vector<1x128xf32> to vector<1x1x128xf32>
    tpu.vector_store %arg9[%c0_61, %c7_62, %c0_63], %71 {strides = array<i32>} : memref<1x16x128xf32, #tpu.memory_space<vmem>>, vector<1x1x128xf32>,
    %72 = arith.addf %63, %65 : vector<1x16x128xf32>
    %c0_64 = arith.constant 0 : index
    %c8 = arith.constant 8 : index
    %c0_65 = arith.constant 0 : index
    %c0_66 = arith.constant 0 : index
    %73 = vector.load %arg1[%c0_64, %c8, %c0_65, %c0_66] : memref<1x16x16x128xf32, #tpu.memory_space<vmem>>, vector<1x1x16x128xf32>
    %74 = vector.shape_cast %73 : vector<1x1x16x128xf32> to vector<1x16x128xf32>
    %cst_67 = arith.constant dense<0.000000e+00> : vector<1x128xf32>
    %75 = vector.multi_reduction <add>, %74, %cst_67 [1] : vector<1x16x128xf32> to vector<1x128xf32>
    %cst_68 = arith.constant 6.250000e-02 : f32
    %76 = vector.broadcast %cst_68 : f32 to vector<1x128xf32>
    %77 = arith.mulf %75, %76 : vector<1x128xf32>
    %c0_69 = arith.constant 0 : index
    %c8_70 = arith.constant 8 : index
    %c0_71 = arith.constant 0 : index
    %78 = vector.load %arg9[%c0_69, %c8_70, %c0_71] : memref<1x16x128xf32, #tpu.memory_space<vmem>>, vector<1x1x128xf32>
    %79 = vector.shape_cast %78 : vector<1x1x128xf32> to vector<1x128xf32>
    %80 = vector.shape_cast %77 : vector<1x128xf32> to vector<1x1x128xf32>
    tpu.vector_store %arg9[%c0_69, %c8_70, %c0_71], %80 {strides = array<i32>} : memref<1x16x128xf32, #tpu.memory_space<vmem>>, vector<1x1x128xf32>,
    %81 = arith.addf %72, %74 : vector<1x16x128xf32>
    %c0_72 = arith.constant 0 : index
    %c9 = arith.constant 9 : index
    %c0_73 = arith.constant 0 : index
    %c0_74 = arith.constant 0 : index
    %82 = vector.load %arg1[%c0_72, %c9, %c0_73, %c0_74] : memref<1x16x16x128xf32, #tpu.memory_space<vmem>>, vector<1x1x16x128xf32>
    %83 = vector.shape_cast %82 : vector<1x1x16x128xf32> to vector<1x16x128xf32>
    %cst_75 = arith.constant dense<0.000000e+00> : vector<1x128xf32>
    %84 = vector.multi_reduction <add>, %83, %cst_75 [1] : vector<1x16x128xf32> to vector<1x128xf32>
    %cst_76 = arith.constant 6.250000e-02 : f32
    %85 = vector.broadcast %cst_76 : f32 to vector<1x128xf32>
    %86 = arith.mulf %84, %85 : vector<1x128xf32>
    %c0_77 = arith.constant 0 : index
    %c9_78 = arith.constant 9 : index
    %c0_79 = arith.constant 0 : index
    %87 = vector.load %arg9[%c0_77, %c9_78, %c0_79] : memref<1x16x128xf32, #tpu.memory_space<vmem>>, vector<1x1x128xf32>
    %88 = vector.shape_cast %87 : vector<1x1x128xf32> to vector<1x128xf32>
    %89 = vector.shape_cast %86 : vector<1x128xf32> to vector<1x1x128xf32>
    tpu.vector_store %arg9[%c0_77, %c9_78, %c0_79], %89 {strides = array<i32>} : memref<1x16x128xf32, #tpu.memory_space<vmem>>, vector<1x1x128xf32>,
    %90 = arith.addf %81, %83 : vector<1x16x128xf32>
    %c0_80 = arith.constant 0 : index
    %c10 = arith.constant 10 : index
    %c0_81 = arith.constant 0 : index
    %c0_82 = arith.constant 0 : index
    %91 = vector.load %arg1[%c0_80, %c10, %c0_81, %c0_82] : memref<1x16x16x128xf32, #tpu.memory_space<vmem>>, vector<1x1x16x128xf32>
    %92 = vector.shape_cast %91 : vector<1x1x16x128xf32> to vector<1x16x128xf32>
    %cst_83 = arith.constant dense<0.000000e+00> : vector<1x128xf32>
    %93 = vector.multi_reduction <add>, %92, %cst_83 [1] : vector<1x16x128xf32> to vector<1x128xf32>
    %cst_84 = arith.constant 6.250000e-02 : f32
    %94 = vector.broadcast %cst_84 : f32 to vector<1x128xf32>
    %95 = arith.mulf %93, %94 : vector<1x128xf32>
    %c0_85 = arith.constant 0 : index
    %c10_86 = arith.constant 10 : index
    %c0_87 = arith.constant 0 : index
    %96 = vector.load %arg9[%c0_85, %c10_86, %c0_87] : memref<1x16x128xf32, #tpu.memory_space<vmem>>, vector<1x1x128xf32>
    %97 = vector.shape_cast %96 : vector<1x1x128xf32> to vector<1x128xf32>
    %98 = vector.shape_cast %95 : vector<1x128xf32> to vector<1x1x128xf32>
    tpu.vector_store %arg9[%c0_85, %c10_86, %c0_87], %98 {strides = array<i32>} : memref<1x16x128xf32, #tpu.memory_space<vmem>>, vector<1x1x128xf32>,
    %99 = arith.addf %90, %92 : vector<1x16x128xf32>
    %c0_88 = arith.constant 0 : index
    %c11 = arith.constant 11 : index
    %c0_89 = arith.constant 0 : index
    %c0_90 = arith.constant 0 : index
    %100 = vector.load %arg1[%c0_88, %c11, %c0_89, %c0_90] : memref<1x16x16x128xf32, #tpu.memory_space<vmem>>, vector<1x1x16x128xf32>
    %101 = vector.shape_cast %100 : vector<1x1x16x128xf32> to vector<1x16x128xf32>
    %cst_91 = arith.constant dense<0.000000e+00> : vector<1x128xf32>
    %102 = vector.multi_reduction <add>, %101, %cst_91 [1] : vector<1x16x128xf32> to vector<1x128xf32>
    %cst_92 = arith.constant 6.250000e-02 : f32
    %103 = vector.broadcast %cst_92 : f32 to vector<1x128xf32>
    %104 = arith.mulf %102, %103 : vector<1x128xf32>
    %c0_93 = arith.constant 0 : index
    %c11_94 = arith.constant 11 : index
    %c0_95 = arith.constant 0 : index
    %105 = vector.load %arg9[%c0_93, %c11_94, %c0_95] : memref<1x16x128xf32, #tpu.memory_space<vmem>>, vector<1x1x128xf32>
    %106 = vector.shape_cast %105 : vector<1x1x128xf32> to vector<1x128xf32>
    %107 = vector.shape_cast %104 : vector<1x128xf32> to vector<1x1x128xf32>
    tpu.vector_store %arg9[%c0_93, %c11_94, %c0_95], %107 {strides = array<i32>} : memref<1x16x128xf32, #tpu.memory_space<vmem>>, vector<1x1x128xf32>,
    %108 = arith.addf %99, %101 : vector<1x16x128xf32>
    %c0_96 = arith.constant 0 : index
    %c12 = arith.constant 12 : index
    %c0_97 = arith.constant 0 : index
    %c0_98 = arith.constant 0 : index
    %109 = vector.load %arg1[%c0_96, %c12, %c0_97, %c0_98] : memref<1x16x16x128xf32, #tpu.memory_space<vmem>>, vector<1x1x16x128xf32>
    %110 = vector.shape_cast %109 : vector<1x1x16x128xf32> to vector<1x16x128xf32>
    %cst_99 = arith.constant dense<0.000000e+00> : vector<1x128xf32>
    %111 = vector.multi_reduction <add>, %110, %cst_99 [1] : vector<1x16x128xf32> to vector<1x128xf32>
    %cst_100 = arith.constant 6.250000e-02 : f32
    %112 = vector.broadcast %cst_100 : f32 to vector<1x128xf32>
    %113 = arith.mulf %111, %112 : vector<1x128xf32>
    %c0_101 = arith.constant 0 : index
    %c12_102 = arith.constant 12 : index
    %c0_103 = arith.constant 0 : index
    %114 = vector.load %arg9[%c0_101, %c12_102, %c0_103] : memref<1x16x128xf32, #tpu.memory_space<vmem>>, vector<1x1x128xf32>
    %115 = vector.shape_cast %114 : vector<1x1x128xf32> to vector<1x128xf32>
    %116 = vector.shape_cast %113 : vector<1x128xf32> to vector<1x1x128xf32>
    tpu.vector_store %arg9[%c0_101, %c12_102, %c0_103], %116 {strides = array<i32>} : memref<1x16x128xf32, #tpu.memory_space<vmem>>, vector<1x1x128xf32>,
    %117 = arith.addf %108, %110 : vector<1x16x128xf32>
    %c0_104 = arith.constant 0 : index
    %c13 = arith.constant 13 : index
    %c0_105 = arith.constant 0 : index
    %c0_106 = arith.constant 0 : index
    %118 = vector.load %arg1[%c0_104, %c13, %c0_105, %c0_106] : memref<1x16x16x128xf32, #tpu.memory_space<vmem>>, vector<1x1x16x128xf32>
    %119 = vector.shape_cast %118 : vector<1x1x16x128xf32> to vector<1x16x128xf32>
    %cst_107 = arith.constant dense<0.000000e+00> : vector<1x128xf32>
    %120 = vector.multi_reduction <add>, %119, %cst_107 [1] : vector<1x16x128xf32> to vector<1x128xf32>
    %cst_108 = arith.constant 6.250000e-02 : f32
    %121 = vector.broadcast %cst_108 : f32 to vector<1x128xf32>
    %122 = arith.mulf %120, %121 : vector<1x128xf32>
    %c0_109 = arith.constant 0 : index
    %c13_110 = arith.constant 13 : index
    %c0_111 = arith.constant 0 : index
    %123 = vector.load %arg9[%c0_109, %c13_110, %c0_111] : memref<1x16x128xf32, #tpu.memory_space<vmem>>, vector<1x1x128xf32>
    %124 = vector.shape_cast %123 : vector<1x1x128xf32> to vector<1x128xf32>
    %125 = vector.shape_cast %122 : vector<1x128xf32> to vector<1x1x128xf32>
    tpu.vector_store %arg9[%c0_109, %c13_110, %c0_111], %125 {strides = array<i32>} : memref<1x16x128xf32, #tpu.memory_space<vmem>>, vector<1x1x128xf32>,
    %126 = arith.addf %117, %119 : vector<1x16x128xf32>
    %c0_112 = arith.constant 0 : index
    %c14 = arith.constant 14 : index
    %c0_113 = arith.constant 0 : index
    %c0_114 = arith.constant 0 : index
    %127 = vector.load %arg1[%c0_112, %c14, %c0_113, %c0_114] : memref<1x16x16x128xf32, #tpu.memory_space<vmem>>, vector<1x1x16x128xf32>
    %128 = vector.shape_cast %127 : vector<1x1x16x128xf32> to vector<1x16x128xf32>
    %cst_115 = arith.constant dense<0.000000e+00> : vector<1x128xf32>
    %129 = vector.multi_reduction <add>, %128, %cst_115 [1] : vector<1x16x128xf32> to vector<1x128xf32>
    %cst_116 = arith.constant 6.250000e-02 : f32
    %130 = vector.broadcast %cst_116 : f32 to vector<1x128xf32>
    %131 = arith.mulf %129, %130 : vector<1x128xf32>
    %c0_117 = arith.constant 0 : index
    %c14_118 = arith.constant 14 : index
    %c0_119 = arith.constant 0 : index
    %132 = vector.load %arg9[%c0_117, %c14_118, %c0_119] : memref<1x16x128xf32, #tpu.memory_space<vmem>>, vector<1x1x128xf32>
    %133 = vector.shape_cast %132 : vector<1x1x128xf32> to vector<1x128xf32>
    %134 = vector.shape_cast %131 : vector<1x128xf32> to vector<1x1x128xf32>
    tpu.vector_store %arg9[%c0_117, %c14_118, %c0_119], %134 {strides = array<i32>} : memref<1x16x128xf32, #tpu.memory_space<vmem>>, vector<1x1x128xf32>,
    %135 = arith.addf %126, %128 : vector<1x16x128xf32>
    %c0_120 = arith.constant 0 : index
    %c15 = arith.constant 15 : index
    %c0_121 = arith.constant 0 : index
    %c0_122 = arith.constant 0 : index
    %136 = vector.load %arg1[%c0_120, %c15, %c0_121, %c0_122] : memref<1x16x16x128xf32, #tpu.memory_space<vmem>>, vector<1x1x16x128xf32>
    %137 = vector.shape_cast %136 : vector<1x1x16x128xf32> to vector<1x16x128xf32>
    %cst_123 = arith.constant dense<0.000000e+00> : vector<1x128xf32>
    %138 = vector.multi_reduction <add>, %137, %cst_123 [1] : vector<1x16x128xf32> to vector<1x128xf32>
    %cst_124 = arith.constant 6.250000e-02 : f32
    %139 = vector.broadcast %cst_124 : f32 to vector<1x128xf32>
    %140 = arith.mulf %138, %139 : vector<1x128xf32>
    %c0_125 = arith.constant 0 : index
    %c15_126 = arith.constant 15 : index
    %c0_127 = arith.constant 0 : index
    %141 = vector.load %arg9[%c0_125, %c15_126, %c0_127] : memref<1x16x128xf32, #tpu.memory_space<vmem>>, vector<1x1x128xf32>
    %142 = vector.shape_cast %141 : vector<1x1x128xf32> to vector<1x128xf32>
    %143 = vector.shape_cast %140 : vector<1x128xf32> to vector<1x1x128xf32>
    tpu.vector_store %arg9[%c0_125, %c15_126, %c0_127], %143 {strides = array<i32>} : memref<1x16x128xf32, #tpu.memory_space<vmem>>, vector<1x1x128xf32>,
    %144 = arith.addf %135, %137 : vector<1x16x128xf32>
    %c0_128 = arith.constant 0 : index
    %c0_129 = arith.constant 0 : index
    %c0_130 = arith.constant 0 : index
    %145 = vector.load %arg9[%c0_128, %c0_129, %c0_130] : memref<1x16x128xf32, #tpu.memory_space<vmem>>, vector<1x16x128xf32>
    %cst_131 = arith.constant 6.250000e-02 : f32
    %146 = vector.broadcast %cst_131 : f32 to vector<1x16x128xf32>
    %147 = arith.mulf %144, %146 : vector<1x16x128xf32>
    %c0_132 = arith.constant 0 : index
    %c0_133 = arith.constant 0 : index
    %148 = vector.load %arg2[%c0_132, %c0_133] : memref<128x8xf32, #tpu.memory_space<vmem>>, vector<128x8xf32>
    %c0_134 = arith.constant 0 : index
    %c0_135 = arith.constant 0 : index
    %149 = vector.load %arg3[%c0_134, %c0_135] : memref<1x8xf32, #tpu.memory_space<vmem>>, vector<1x8xf32>
    %150 = vector.shape_cast %145 : vector<1x16x128xf32> to vector<16x128xf32>
    %cst_136 = arith.constant dense<0.000000e+00> : vector<16x8xf32>
    %151 = tpu.matmul %150, %148, %cst_136 {dimension_numbers = #tpu.dot_dimension_numbers<[1], [0], [0], [1], [0, 0, 1, 1], [], []>} : vector<16x128xf32>, vector<128x8xf32>, vector<16x8xf32> -> vector<16x8xf32>
    %152 = vector.broadcast %149 : vector<1x8xf32> to vector<16x8xf32>
    %153 = arith.addf %151, %152 : vector<16x8xf32>
    %cst_137 = arith.constant 3.000000e+00 : f32
    %154 = vector.broadcast %cst_137 : f32 to vector<16x8xf32>
    %155 = arith.addf %153, %154 : vector<16x8xf32>
    %cst_138 = arith.constant 0.000000e+00 : f32
    %cst_139 = arith.constant 6.000000e+00 : f32
    %156 = vector.broadcast %cst_138 : f32 to vector<16x8xf32>
    %157 = arith.maximumf %156, %155 : vector<16x8xf32>
    %158 = vector.broadcast %cst_139 : f32 to vector<16x8xf32>
    %159 = arith.minimumf %158, %157 : vector<16x8xf32>
    %cst_140 = arith.constant 0.166666672 : f32
    %160 = vector.broadcast %cst_140 : f32 to vector<16x8xf32>
    %161 = arith.mulf %159, %160 : vector<16x8xf32>
    %162 = arith.mulf %153, %161 : vector<16x8xf32>
    %c0_141 = arith.constant 0 : index
    %c0_142 = arith.constant 0 : index
    %163 = vector.load %arg4[%c0_141, %c0_142] : memref<8x128xf32, #tpu.memory_space<vmem>>, vector<8x128xf32>
    %cst_143 = arith.constant dense<0.000000e+00> : vector<16x128xf32>
    %164 = tpu.matmul %162, %163, %cst_143 {dimension_numbers = #tpu.dot_dimension_numbers<[1], [0], [0], [1], [0, 0, 1, 1], [], []>} : vector<16x8xf32>, vector<8x128xf32>, vector<16x128xf32> -> vector<16x128xf32>
    %c0_144 = arith.constant 0 : index
    %c0_145 = arith.constant 0 : index
    %165 = vector.load %arg5[%c0_144, %c0_145] : memref<1x128xf32, #tpu.memory_space<vmem>>, vector<1x128xf32>
    %166 = vector.broadcast %165 : vector<1x128xf32> to vector<16x128xf32>
    %167 = arith.addf %164, %166 : vector<16x128xf32>
    %cst_146 = arith.constant 5.000000e-01 : f32
    %168 = vector.broadcast %cst_146 : f32 to vector<16x128xf32>
    %169 = arith.mulf %168, %167 : vector<16x128xf32>
    %170 = math.tanh %169 : vector<16x128xf32>
    %cst_147 = arith.constant 5.000000e-01 : f32
    %171 = vector.broadcast %cst_147 : f32 to vector<16x128xf32>
    %172 = arith.mulf %171, %170 : vector<16x128xf32>
    %cst_148 = arith.constant 5.000000e-01 : f32
    %173 = vector.broadcast %cst_148 : f32 to vector<16x128xf32>
    %174 = arith.addf %172, %173 : vector<16x128xf32>
    %175 = vector.shape_cast %174 : vector<16x128xf32> to vector<1x16x128xf32>
    %176 = vector.shape_cast %147 : vector<1x16x128xf32> to vector<16x128xf32>
    %cst_149 = arith.constant dense<0.000000e+00> : vector<16x8xf32>
    %177 = tpu.matmul %176, %148, %cst_149 {dimension_numbers = #tpu.dot_dimension_numbers<[1], [0], [0], [1], [0, 0, 1, 1], [], []>} : vector<16x128xf32>, vector<128x8xf32>, vector<16x8xf32> -> vector<16x8xf32>
    %178 = vector.broadcast %149 : vector<1x8xf32> to vector<16x8xf32>
    %179 = arith.addf %177, %178 : vector<16x8xf32>
    %cst_150 = arith.constant 3.000000e+00 : f32
    %180 = vector.broadcast %cst_150 : f32 to vector<16x8xf32>
    %181 = arith.addf %179, %180 : vector<16x8xf32>
    %cst_151 = arith.constant 0.000000e+00 : f32
    %cst_152 = arith.constant 6.000000e+00 : f32
    %182 = vector.broadcast %cst_151 : f32 to vector<16x8xf32>
    %183 = arith.maximumf %182, %181 : vector<16x8xf32>
    %184 = vector.broadcast %cst_152 : f32 to vector<16x8xf32>
    %185 = arith.minimumf %184, %183 : vector<16x8xf32>
    %cst_153 = arith.constant 0.166666672 : f32
    %186 = vector.broadcast %cst_153 : f32 to vector<16x8xf32>
    %187 = arith.mulf %185, %186 : vector<16x8xf32>
    %188 = arith.mulf %179, %187 : vector<16x8xf32>
    %c0_154 = arith.constant 0 : index
    %c0_155 = arith.constant 0 : index
    %189 = vector.load %arg6[%c0_154, %c0_155] : memref<8x128xf32, #tpu.memory_space<vmem>>, vector<8x128xf32>
    %cst_156 = arith.constant dense<0.000000e+00> : vector<16x128xf32>
    %190 = tpu.matmul %188, %189, %cst_156 {dimension_numbers = #tpu.dot_dimension_numbers<[1], [0], [0], [1], [0, 0, 1, 1], [], []>} : vector<16x8xf32>, vector<8x128xf32>, vector<16x128xf32> -> vector<16x128xf32>
    %c0_157 = arith.constant 0 : index
    %c0_158 = arith.constant 0 : index
    %191 = vector.load %arg7[%c0_157, %c0_158] : memref<1x128xf32, #tpu.memory_space<vmem>>, vector<1x128xf32>
    %192 = vector.broadcast %191 : vector<1x128xf32> to vector<16x128xf32>
    %193 = arith.addf %190, %192 : vector<16x128xf32>
    %cst_159 = arith.constant 5.000000e-01 : f32
    %194 = vector.broadcast %cst_159 : f32 to vector<16x128xf32>
    %195 = arith.mulf %194, %193 : vector<16x128xf32>
    %196 = math.tanh %195 : vector<16x128xf32>
    %cst_160 = arith.constant 5.000000e-01 : f32
    %197 = vector.broadcast %cst_160 : f32 to vector<16x128xf32>
    %198 = arith.mulf %197, %196 : vector<16x128xf32>
    %cst_161 = arith.constant 5.000000e-01 : f32
    %199 = vector.broadcast %cst_161 : f32 to vector<16x128xf32>
    %200 = arith.addf %198, %199 : vector<16x128xf32>
    %201 = vector.shape_cast %200 : vector<16x128xf32> to vector<1x16x128xf32>
    %c0_162 = arith.constant 0 : index
    %c0_163 = arith.constant 0 : index
    %c0_164 = arith.constant 0 : index
    %c0_165 = arith.constant 0 : index
    %202 = vector.load %arg1[%c0_162, %c0_163, %c0_164, %c0_165] : memref<1x16x16x128xf32, #tpu.memory_space<vmem>>, vector<1x16x16x128xf32>
    %203 = vector.shape_cast %202 : vector<1x16x16x128xf32> to vector<16x16x128xf32>
    %204 = vector.shape_cast %175 : vector<1x16x128xf32> to vector<16x128xf32>
    %205 = vector.shape_cast %204 : vector<16x128xf32> to vector<16x1x128xf32>
    %206 = vector.broadcast %205 : vector<16x1x128xf32> to vector<16x16x128xf32>
    %207 = arith.mulf %203, %206 : vector<16x16x128xf32>
    %208 = vector.shape_cast %201 : vector<1x16x128xf32> to vector<16x128xf32>
    %209 = vector.shape_cast %208 : vector<16x128xf32> to vector<1x16x128xf32>
    %210 = vector.broadcast %209 : vector<1x16x128xf32> to vector<16x16x128xf32>
    %211 = arith.mulf %207, %210 : vector<16x16x128xf32>
    %c0_166 = arith.constant 0 : index
    %c0_167 = arith.constant 0 : index
    %c0_168 = arith.constant 0 : index
    %c0_169 = arith.constant 0 : index
    %212 = vector.load %arg8[%c0_166, %c0_167, %c0_168, %c0_169] : memref<1x16x16x128xf32, #tpu.memory_space<vmem>>, vector<1x16x16x128xf32>
    %213 = vector.shape_cast %212 : vector<1x16x16x128xf32> to vector<16x16x128xf32>
    %214 = vector.shape_cast %211 : vector<16x16x128xf32> to vector<1x16x16x128xf32>
    tpu.vector_store %arg8[%c0_166, %c0_167, %c0_168, %c0_169], %214 {strides = array<i32>} : memref<1x16x16x128xf32, #tpu.memory_space<vmem>>, vector<1x16x16x128xf32>,
    return
  }
  func.func @transform_0(%arg0: i32) -> (i32, i32, i32, i32) {
    %c0_i32 = arith.constant 0 : i32
    %c0_i32_0 = arith.constant 0 : i32
    %c0_i32_1 = arith.constant 0 : i32
    %c0_i32_2 = arith.constant 0 : i32
    return %arg0, %c0_i32, %c0_i32_0, %c0_i32_1 : i32, i32, i32, i32
  }
  func.func @transform_1(%arg0: i32) -> (i32, i32) {
    %c0_i32 = arith.constant 0 : i32
    %c0_i32_0 = arith.constant 0 : i32
    %c0_i32_1 = arith.constant 0 : i32
    return %c0_i32, %c0_i32_0 : i32, i32
  }
  func.func @transform_2(%arg0: i32) -> (i32, i32) {
    %c0_i32 = arith.constant 0 : i32
    %c0_i32_0 = arith.constant 0 : i32
    %c0_i32_1 = arith.constant 0 : i32
    return %c0_i32, %c0_i32_0 : i32, i32
  }
  func.func @transform_3(%arg0: i32) -> (i32, i32) {
    %c0_i32 = arith.constant 0 : i32
    %c0_i32_0 = arith.constant 0 : i32
    %c0_i32_1 = arith.constant 0 : i32
    return %c0_i32, %c0_i32_0 : i32, i32
  }
  func.func @transform_4(%arg0: i32) -> (i32, i32) {
    %c0_i32 = arith.constant 0 : i32
    %c0_i32_0 = arith.constant 0 : i32
    %c0_i32_1 = arith.constant 0 : i32
    return %c0_i32, %c0_i32_0 : i32, i32
  }
  func.func @transform_5(%arg0: i32) -> (i32, i32) {
    %c0_i32 = arith.constant 0 : i32
    %c0_i32_0 = arith.constant 0 : i32
    %c0_i32_1 = arith.constant 0 : i32
    return %c0_i32, %c0_i32_0 : i32, i32
  }
  func.func @transform_6(%arg0: i32) -> (i32, i32) {
    %c0_i32 = arith.constant 0 : i32
    %c0_i32_0 = arith.constant 0 : i32
    %c0_i32_1 = arith.constant 0 : i32
    return %c0_i32, %c0_i32_0 : i32, i32
  }
  func.func @transform_7(%arg0: i32) -> (i32, i32, i32, i32) {
    %c0_i32 = arith.constant 0 : i32
    %c0_i32_0 = arith.constant 0 : i32
    %c0_i32_1 = arith.constant 0 : i32
    %c0_i32_2 = arith.constant 0 : i32
    return %arg0, %c0_i32, %c0_i32_0, %c0_i32_1 : i32, i32, i32, i32
  }
}

</mosaic_0001>

<llo_original>
// kernel: coord_att_forward.1
$region0: #{coord_att_forward.1}
  #allocation0 [shape = 'u32[]', space=smem, size = 0x4, offset = 0x4, fixed_abs, tag = 'smem constant byte address 0x4 - core index']
  #allocation1 [shape = 'u32[72,128]{1,0:T(1,128)}', space=vmem, size = 0x9000, scoped, tag = 'internal scratch']
  #allocation2 [shape = 'f32[1,16,128]{2,1,0:T(8,128)}', space=vmem, size = 0x2000, scoped, tag = 'scratch operand']
  %s0 = inlined_call_operand.hbm [shape: f32[2,16,16,128], index: 0, kind: input, shape index: {}]
  %s1 = inlined_call_operand.vmem [shape: f32[128,8], index: 1, kind: input, shape index: {}]
  %s2 = inlined_call_operand.vmem [shape: f32[1,8], index: 2, kind: input, shape index: {}]
  %s3 = inlined_call_operand.vmem [shape: f32[8,128], index: 3, kind: input, shape index: {}]
  %s4 = inlined_call_operand.vmem [shape: f32[1,128], index: 4, kind: input, shape index: {}]
  %s5 = inlined_call_operand.vmem [shape: f32[8,128], index: 5, kind: input, shape index: {}]
  %s6 = inlined_call_operand.vmem [shape: f32[1,128], index: 6, kind: input, shape index: {}]
  %s7 = inlined_call_operand.hbm [shape: f32[2,16,16,128], index: 7, kind: output, shape index: {}]
  %s8 = sld [smem:[#allocation0]]
  $region65: #{coord_att_forward.1} parent=0
    _
  %s10 = ssub.s32 1, %s8
  %s11 = scalar_select 0, %s10, %s8
  $region1: #{coord_att_forward.1} parent=0
    #allocation3 [shape = 'u8[262144]{0}', space=vmem, size = 0x40000, scoped, tag = 'input window, operand 0']
    #allocation4 [shape = 's32[2]{0}', space=sflag, size = 0x8, scoped, tag = 'scoped memory for coord_att_forward.1']
    #allocation5 [shape = 's32[2]{0}', space=sflag, size = 0x8, scoped, tag = 'scoped memory for coord_att_forward.1']
    #allocation6 [shape = 'u8[262144]{0}', space=vmem, size = 0x40000, scoped, tag = 'output window, operand 0']
    %12 = vsyncpa [#allocation4], 0
    %s13 = scalar_lea.sflag [#allocation4], 1
    %14 = vsyncpa %s13, 0
    %15 = vsyncpa [#allocation5], 0
    %s16 = scalar_lea.sflag [#allocation5], 1
    %17 = vsyncpa %s16, 0
    loop: start=0, step=1, limit=4
    $region2: #{coord_att_forward.1} parent=1 // loop_pre_header
      _
    $region3: #{coord_att_forward.1} parent=1 // loop_header
      %s19 = sphi 0, %s23
      %p20 = scmp.ge.s32.totalorder %s19, 4
      %s29 = sphi 0, %s31
      %s32 = sphi 0, %s29
      %s33 = sphi 0, %s32
      %s49 = sphi 0, %s33
      %s53 = sphi 0, %s53
      %s55 = sphi 0, %s53
      %s56 = sphi 0, %s55
      %s70 = sphi 0, %s56
      %s74 = sphi 0, %s74
      %s76 = sphi 0, %s74
      %s77 = sphi 0, %s76
      %s91 = sphi 0, %s77
      %s95 = sphi 0, %s95
      %s97 = sphi 0, %s95
      %s98 = sphi 0, %s97
      %s112 = sphi 0, %s98
      %s116 = sphi 0, %s116
      %s118 = sphi 0, %s116
      %s119 = sphi 0, %s118
      %s133 = sphi 0, %s119
      %s137 = sphi 0, %s137
      %s139 = sphi 0, %s137
      %s140 = sphi 0, %s139
      %s154 = sphi 0, %s140
      %s158 = sphi 0, %s158
      %s160 = sphi 0, %s158
      %s161 = sphi 0, %s160
      %s175 = sphi 0, %s161
      %s181 = sphi 0, %s183
      %s184 = sphi 0, %s181
      %s185 = sphi 0, %s184
      %s201 = sphi 0, %s185
    $region4: #{coord_att_forward.1} parent=1 // loop_header_branch
      %22 = sbr.rel (%p20) target = $region8
    $region5: #{coord_att_forward.1} parent=1 // loop_body
      %s24 = ssub.s32 %s19, 1
      %s25 = ssub.s32 %s19, 2
      %s26 = sadd.s32 %s19, 1
      %s27 = ssub.s32 %s19, %s26
      %p28 = scmp.eq.s32.totalorder %s27, 0
      %s30 = sadd.s32 %s29, 1
      %s31 = scalar_select %p28, %s29, %s30
      %p34 = pneg %p28
      %p35 = scmp.eq.s32.totalorder %s19, 1
      %p36 = por %p34, %p35
      %p37 = scmp.ne.s32.totalorder %s29, %s32
      %p38 = scmp.eq.s32.totalorder %s19, 0
      %p39 = por %p37, %p38
      %p40 = scmp.ne.s32.totalorder %s29, %s32
      %p41 = scmp.eq.s32.totalorder %s24, 1
      %p42 = por %p40, %p41
      %p43 = scmp.ne.s32.totalorder %s32, %s33
      %p44 = scmp.eq.s32.totalorder %s24, 0
      %p45 = por %p43, %p44
      %p46 = scmp.ne.s32.totalorder %s32, %s33
      %p47 = scmp.eq.s32.totalorder %s25, 1
      %p48 = por %p46, %p47
      %p50 = scmp.ne.s32.totalorder %s33, %s49
      %p51 = scmp.eq.s32.totalorder %s25, 0
      %p52 = por %p50, %p51
      %s54 = sadd.s32 %s53, 1
      %p57 = scmp.eq.s32.totalorder %s19, 1
      %p58 = scmp.ne.s32.totalorder %s53, %s55
      %p59 = scmp.eq.s32.totalorder %s19, 0
      %p60 = por %p58, %p59
      %p61 = scmp.ne.s32.totalorder %s53, %s55
      %p62 = scmp.eq.s32.totalorder %s24, 1
      %p63 = por %p61, %p62
      %p64 = scmp.ne.s32.totalorder %s55, %s56
      %p65 = scmp.eq.s32.totalorder %s24, 0
      %p66 = por %p64, %p65
      %p67 = scmp.ne.s32.totalorder %s55, %s56
      %p68 = scmp.eq.s32.totalorder %s25, 1
      %p69 = por %p67, %p68
      %p71 = scmp.ne.s32.totalorder %s56, %s70
      %p72 = scmp.eq.s32.totalorder %s25, 0
      %p73 = por %p71, %p72
      %s75 = sadd.s32 %s74, 1
      %p78 = scmp.eq.s32.totalorder %s19, 1
      %p79 = scmp.ne.s32.totalorder %s74, %s76
      %p80 = scmp.eq.s32.totalorder %s19, 0
      %p81 = por %p79, %p80
      %p82 = scmp.ne.s32.totalorder %s74, %s76
      %p83 = scmp.eq.s32.totalorder %s24, 1
      %p84 = por %p82, %p83
      %p85 = scmp.ne.s32.totalorder %s76, %s77
      %p86 = scmp.eq.s32.totalorder %s24, 0
      %p87 = por %p85, %p86
      %p88 = scmp.ne.s32.totalorder %s76, %s77
      %p89 = scmp.eq.s32.totalorder %s25, 1
      %p90 = por %p88, %p89
      %p92 = scmp.ne.s32.totalorder %s77, %s91
      %p93 = scmp.eq.s32.totalorder %s25, 0
      %p94 = por %p92, %p93
      %s96 = sadd.s32 %s95, 1
      %p99 = scmp.eq.s32.totalorder %s19, 1
      %p100 = scmp.ne.s32.totalorder %s95, %s97
      %p101 = scmp.eq.s32.totalorder %s19, 0
      %p102 = por %p100, %p101
      %p103 = scmp.ne.s32.totalorder %s95, %s97
      %p104 = scmp.eq.s32.totalorder %s24, 1
      %p105 = por %p103, %p104
      %p106 = scmp.ne.s32.totalorder %s97, %s98
      %p107 = scmp.eq.s32.totalorder %s24, 0
      %p108 = por %p106, %p107
      %p109 = scmp.ne.s32.totalorder %s97, %s98
      %p110 = scmp.eq.s32.totalorder %s25, 1
      %p111 = por %p109, %p110
      %p113 = scmp.ne.s32.totalorder %s98, %s112
      %p114 = scmp.eq.s32.totalorder %s25, 0
      %p115 = por %p113, %p114
      %s117 = sadd.s32 %s116, 1
      %p120 = scmp.eq.s32.totalorder %s19, 1
      %p121 = scmp.ne.s32.totalorder %s116, %s118
      %p122 = scmp.eq.s32.totalorder %s19, 0
      %p123 = por %p121, %p122
      %p124 = scmp.ne.s32.totalorder %s116, %s118
      %p125 = scmp.eq.s32.totalorder %s24, 1
      %p126 = por %p124, %p125
      %p127 = scmp.ne.s32.totalorder %s118, %s119
      %p128 = scmp.eq.s32.totalorder %s24, 0
      %p129 = por %p127, %p128
      %p130 = scmp.ne.s32.totalorder %s118, %s119
      %p131 = scmp.eq.s32.totalorder %s25, 1
      %p132 = por %p130, %p131
      %p134 = scmp.ne.s32.totalorder %s119, %s133
      %p135 = scmp.eq.s32.totalorder %s25, 0
      %p136 = por %p134, %p135
      %s138 = sadd.s32 %s137, 1
      %p141 = scmp.eq.s32.totalorder %s19, 1
      %p142 = scmp.ne.s32.totalorder %s137, %s139
      %p143 = scmp.eq.s32.totalorder %s19, 0
      %p144 = por %p142, %p143
      %p145 = scmp.ne.s32.totalorder %s137, %s139
      %p146 = scmp.eq.s32.totalorder %s24, 1
      %p147 = por %p145, %p146
      %p148 = scmp.ne.s32.totalorder %s139, %s140
      %p149 = scmp.eq.s32.totalorder %s24, 0
      %p150 = por %p148, %p149
      %p151 = scmp.ne.s32.totalorder %s139, %s140
      %p152 = scmp.eq.s32.totalorder %s25, 1
      %p153 = por %p151, %p152
      %p155 = scmp.ne.s32.totalorder %s140, %s154
      %p156 = scmp.eq.s32.totalorder %s25, 0
      %p157 = por %p155, %p156
      %s159 = sadd.s32 %s158, 1
      %p162 = scmp.eq.s32.totalorder %s19, 1
      %p163 = scmp.ne.s32.totalorder %s158, %s160
      %p164 = scmp.eq.s32.totalorder %s19, 0
      %p165 = por %p163, %p164
      %p166 = scmp.ne.s32.totalorder %s158, %s160
      %p167 = scmp.eq.s32.totalorder %s24, 1
      %p168 = por %p166, %p167
      %p169 = scmp.ne.s32.totalorder %s160, %s161
      %p170 = scmp.eq.s32.totalorder %s24, 0
      %p171 = por %p169, %p170
      %p172 = scmp.ne.s32.totalorder %s160, %s161
      %p173 = scmp.eq.s32.totalorder %s25, 1
      %p174 = por %p172, %p173
      %p176 = scmp.ne.s32.totalorder %s161, %s175
      %p177 = scmp.eq.s32.totalorder %s25, 0
      %p178 = por %p176, %p177
      %s179 = ssub.s32 %s19, %s26
      %p180 = scmp.eq.s32.totalorder %s179, 0
      %s182 = sadd.s32 %s181, 1
      %s183 = scalar_select %p180, %s181, %s182
      %p186 = pneg %p180
      %p187 = scmp.eq.s32.totalorder %s19, 1
      %p188 = por %p186, %p187
      %p189 = scmp.ne.s32.totalorder %s181, %s184
      %p190 = scmp.eq.s32.totalorder %s19, 0
      %p191 = por %p189, %p190
      %p192 = scmp.ne.s32.totalorder %s181, %s184
      %p193 = scmp.eq.s32.totalorder %s24, 1
      %p194 = por %p192, %p193
      %p195 = scmp.ne.s32.totalorder %s184, %s185
      %p196 = scmp.eq.s32.totalorder %s24, 0
      %p197 = por %p195, %p196
      %p198 = scmp.ne.s32.totalorder %s184, %s185
      %p199 = scmp.eq.s32.totalorder %s25, 1
      %p200 = por %p198, %p199
      %p202 = scmp.ne.s32.totalorder %s185, %s201
      %p203 = scmp.eq.s32.totalorder %s25, 0
      %p204 = por %p202, %p203
      %p205 = scmp.le.s32.totalorder 1, %s19
      %p206 = scmp.lt.s32.totalorder %s19, 3
      %p207 = pnand %p205, %p206
      %p208 = pneg %p207
      // Predicated region
      $region9: #{coord_att_forward.1} parent=5 // pred_check
        _
      $region10: #{coord_att_forward.1} parent=5 // pred_check_branch
        %210 = sbr.rel (%p207) target = $region12
      $region11: #{coord_att_forward.1} parent=5 // pred_region
        %s211 = ssub.s32 %s19, 1
        // Predicated region
        $region13: #{coord_att_forward.1} parent=11 // pred_check
          %p212 = pneg %p66
        $region14: #{coord_att_forward.1} parent=11 // pred_check_branch
          %214 = sbr.rel (%p212) target = $region16
        $region15: #{coord_att_forward.1} parent=11 // pred_region
          _
        $region16: #{coord_att_forward.1} parent=11 // pred_fallthru
          _
        // Predicated region
        $region17: #{coord_att_forward.1} parent=11 // pred_check
          %p215 = pneg %p87
        $region18: #{coord_att_forward.1} parent=11 // pred_check_branch
          %217 = sbr.rel (%p215) target = $region20
        $region19: #{coord_att_forward.1} parent=11 // pred_region
          _
        $region20: #{coord_att_forward.1} parent=11 // pred_fallthru
          _
        // Predicated region
        $region21: #{coord_att_forward.1} parent=11 // pred_check
          %p218 = pneg %p108
        $region22: #{coord_att_forward.1} parent=11 // pred_check_branch
          %220 = sbr.rel (%p218) target = $region24
        $region23: #{coord_att_forward.1} parent=11 // pred_region
          _
        $region24: #{coord_att_forward.1} parent=11 // pred_fallthru
          _
        // Predicated region
        $region25: #{coord_att_forward.1} parent=11 // pred_check
          %p221 = pneg %p129
        $region26: #{coord_att_forward.1} parent=11 // pred_check_branch
          %223 = sbr.rel (%p221) target = $region28
        $region27: #{coord_att_forward.1} parent=11 // pred_region
          _
        $region28: #{coord_att_forward.1} parent=11 // pred_fallthru
          _
        // Predicated region
        $region29: #{coord_att_forward.1} parent=11 // pred_check
          %p224 = pneg %p150
        $region30: #{coord_att_forward.1} parent=11 // pred_check_branch
          %226 = sbr.rel (%p224) target = $region32
        $region31: #{coord_att_forward.1} parent=11 // pred_region
          _
        $region32: #{coord_att_forward.1} parent=11 // pred_fallthru
          _
        // Predicated region
        $region33: #{coord_att_forward.1} parent=11 // pred_check
          %p227 = pneg %p171
        $region34: #{coord_att_forward.1} parent=11 // pred_check_branch
          %229 = sbr.rel (%p227) target = $region36
        $region35: #{coord_att_forward.1} parent=11 // pred_region
          _
        $region36: #{coord_att_forward.1} parent=11 // pred_fallthru
          _
      $region12: #{coord_att_forward.1} parent=5 // pred_fallthru
        _
      %p230 = scmp.lt.s32.totalorder %s19, 2
      // Predicated region
      $region37: #{coord_att_forward.1} parent=5 // pred_check
        %p231 = pneg %p230
      $region38: #{coord_att_forward.1} parent=5 // pred_check_branch
        %233 = sbr.rel (%p231) target = $region40
      $region39: #{coord_att_forward.1} parent=5 // pred_region
        // Predicated region
        $region41: #{coord_att_forward.1} parent=39 // pred_check
          %p234 = pneg %p39
        $region42: #{coord_att_forward.1} parent=39 // pred_check_branch
          %236 = sbr.rel (%p234) target = $region44
        $region43: #{coord_att_forward.1} parent=39 // pred_region
          %s237 = sand.u32 %s29, 1
          %s238 = scalar_lea.sflag [#allocation4], %s237
          %s239 = sand.u32 %s29, 1
          %s240 = smul.addr %s239, 256
          %s241 = scalar_lea.vmem [#allocation3], %s240
          %243 = vsyncadd %s238, 0
          %s244 = smul.addr %s19, 32
          %s245 = smul.addr %s244, 8
          %s246 = scalar_lea.hbm %s0, %s245
          %s247 = sshll.u32 %s246, 4
          %s248 = int_to_ptr.hbm [resolvable:$true] %s247
          %s249 = sshll.u32 %s241, 4
          %s250 = int_to_ptr.vmem [resolvable:$true] %s249
          %255 = dma.hbm_to_vmem [thread:$0]  %s248, 4096, %s250, %s238, 128, 128, 8
        $region44: #{coord_att_forward.1} parent=39 // pred_fallthru
          _
      $region40: #{coord_att_forward.1} parent=5 // pred_fallthru
        _
      %p256 = scmp.le.s32.totalorder 1, %s19
      %p257 = scmp.lt.s32.totalorder %s19, 3
      %p258 = pnand %p256, %p257
      %p259 = pneg %p258
      // Predicated region
      $region45: #{coord_att_forward.1} parent=5 // pred_check
        _
      $region46: #{coord_att_forward.1} parent=5 // pred_check_branch
        %261 = sbr.rel (%p258) target = $region48
      $region47: #{coord_att_forward.1} parent=5 // pred_region
        %s262 = ssub.s32 %s19, 1
        %s263 = sand.u32 %s32, 1
        %s264 = scalar_lea.sflag [#allocation4], %s263
        %s265 = sand.u32 %s32, 1
        %s266 = smul.addr %s265, 256
        %s267 = scalar_lea.vmem [#allocation3], %s266
        // Predicated region
        $region49: #{coord_att_forward.1} parent=47 // pred_check
          %p268 = pneg %p45
        $region50: #{coord_att_forward.1} parent=47 // pred_check_branch
          %270 = sbr.rel (%p268) target = $region52
        $region51: #{coord_att_forward.1} parent=47 // pred_region
          %272 = dma.done %s264, 4096
        $region52: #{coord_att_forward.1} parent=47 // pred_fallthru
          _
        %s273 = sand.u32 %s32, 1
        %s274 = scalar_lea.sflag [#allocation4], %s273
        %s275 = sand.u32 %s32, 1
        %s276 = smul.addr %s275, 256
        %s277 = scalar_lea.vmem [#allocation3], %s276
        %p278 = pneg %p45
        %p279 = pneg %p42
        %p280 = pneg %p66
        %p281 = pneg %p63
        %p282 = pneg %p87
        %p283 = pneg %p84
        %p284 = pneg %p108
        %p285 = pneg %p105
        %p286 = pneg %p129
        %p287 = pneg %p126
        %p288 = pneg %p150
        %p289 = pneg %p147
        %p290 = pneg %p171
        %p291 = pneg %p168
        %p292 = pneg %p197
        %p293 = pneg %p194
        %s294 = sand.u32 %s184, 1
        %s295 = scalar_lea.sflag [#allocation5], %s294
        %s296 = sand.u32 %s184, 1
        %s297 = smul.addr %s296, 256
        %s298 = scalar_lea.vmem [#allocation6], %s297
        %v299 = vld [vmem:[%s267] sm:$0xff]
        %v300 = vld [vmem:[%s267 + $0x8] sm:$0xff]
        %v301 = vadd.f32 %v299, %v300
        %v302 = vrot.slane %v301, 4
        %v303 = vadd.f32 %v301, %v302
        %v304 = vrot.slane %v303, 2
        %v305 = vadd.f32 %v303, %v304
        %v306 = vrot.slane %v305, 1
        %v307 = vadd.f32 %v305, %v306
        %v308 = vmul.f32 %v307, 0.0625
        %309 = vst [vmem:[#allocation2] sm:$0x1] %v308
        %v310 = vadd.f32 %v299, 0.0
        %v311 = vadd.f32 %v300, 0.0
        %s312 = scalar_lea.vmem %s267, 16 [#allocation3]
        %v313 = vld [vmem:[%s312] sm:$0xff]
        %v314 = vld [vmem:[%s312 + $0x8] sm:$0xff]
        %v315 = vadd.f32 %v313, %v314
        %v316 = vrot.slane %v315, 4
        %v317 = vadd.f32 %v315, %v316
        %v318 = vrot.slane %v317, 2
        %v319 = vadd.f32 %v317, %v318
        %v320 = vrot.slane %v319, 1
        %v321 = vadd.f32 %v319, %v320
        %v322 = vmul.f32 %v321, 0.0625
        %323 = vst [vmem:[#allocation2 + $0x1] sm:$0x1] %v322
        %v324 = vadd.f32 %v310, %v313
        %v325 = vadd.f32 %v311, %v314
        %s326 = scalar_lea.vmem %s267, 32 [#allocation3]
        %v327 = vld [vmem:[%s326] sm:$0xff]
        %v328 = vld [vmem:[%s326 + $0x8] sm:$0xff]
        %v329 = vadd.f32 %v327, %v328
        %v330 = vrot.slane %v329, 4
        %v331 = vadd.f32 %v329, %v330
        %v332 = vrot.slane %v331, 2
        %v333 = vadd.f32 %v331, %v332
        %v334 = vrot.slane %v333, 1
        %v335 = vadd.f32 %v333, %v334
        %v336 = vmul.f32 %v335, 0.0625
        %337 = vst [vmem:[#allocation2 + $0x2] sm:$0x1] %v336
        %v338 = vadd.f32 %v324, %v327
        %v339 = vadd.f32 %v325, %v328
        %s340 = scalar_lea.vmem %s267, 48 [#allocation3]
        %v341 = vld [vmem:[%s340] sm:$0xff]
        %v342 = vld [vmem:[%s340 + $0x8] sm:$0xff]
        %v343 = vadd.f32 %v341, %v342
        %v344 = vrot.slane %v343, 4
        %v345 = vadd.f32 %v343, %v344
        %v346 = vrot.slane %v345, 2
        %v347 = vadd.f32 %v345, %v346
        %v348 = vrot.slane %v347, 1
        %v349 = vadd.f32 %v347, %v348
        %v350 = vmul.f32 %v349, 0.0625
        %351 = vst [vmem:[#allocation2 + $0x3] sm:$0x1] %v350
        %v352 = vadd.f32 %v338, %v341
        %v353 = vadd.f32 %v339, %v342
        %s354 = scalar_lea.vmem %s267, 64 [#allocation3]
        %v355 = vld [vmem:[%s354] sm:$0xff]
        %v356 = vld [vmem:[%s354 + $0x8] sm:$0xff]
        %v357 = vadd.f32 %v355, %v356
        %v358 = vrot.slane %v357, 4
        %v359 = vadd.f32 %v357, %v358
        %v360 = vrot.slane %v359, 2
        %v361 = vadd.f32 %v359, %v360
        %v362 = vrot.slane %v361, 1
        %v363 = vadd.f32 %v361, %v362
        %v364 = vmul.f32 %v363, 0.0625
        %365 = vst [vmem:[#allocation2 + $0x4] sm:$0x1] %v364
        %v366 = vadd.f32 %v352, %v355
        %v367 = vadd.f32 %v353, %v356
        %s368 = scalar_lea.vmem %s267, 80 [#allocation3]
        %v369 = vld [vmem:[%s368] sm:$0xff]
        %v370 = vld [vmem:[%s368 + $0x8] sm:$0xff]
        %v371 = vadd.f32 %v369, %v370
        %v372 = vrot.slane %v371, 4
        %v373 = vadd.f32 %v371, %v372
        %v374 = vrot.slane %v373, 2
        %v375 = vadd.f32 %v373, %v374
        %v376 = vrot.slane %v375, 1
        %v377 = vadd.f32 %v375, %v376
        %v378 = vmul.f32 %v377, 0.0625
        %379 = vst [vmem:[#allocation2 + $0x5] sm:$0x1] %v378
        %v380 = vadd.f32 %v366, %v369
        %v381 = vadd.f32 %v367, %v370
        %s382 = scalar_lea.vmem %s267, 96 [#allocation3]
        %v383 = vld [vmem:[%s382] sm:$0xff]
        %v384 = vld [vmem:[%s382 + $0x8] sm:$0xff]
        %v385 = vadd.f32 %v383, %v384
        %v386 = vrot.slane %v385, 4
        %v387 = vadd.f32 %v385, %v386
        %v388 = vrot.slane %v387, 2
        %v389 = vadd.f32 %v387, %v388
        %v390 = vrot.slane %v389, 1
        %v391 = vadd.f32 %v389, %v390
        %v392 = vmul.f32 %v391, 0.0625
        %393 = vst [vmem:[#allocation2 + $0x6] sm:$0x1] %v392
        %v394 = vadd.f32 %v380, %v383
        %v395 = vadd.f32 %v381, %v384
        %s396 = scalar_lea.vmem %s267, 112 [#allocation3]
        %v397 = vld [vmem:[%s396] sm:$0xff]
        %v398 = vld [vmem:[%s396 + $0x8] sm:$0xff]
        %v399 = vadd.f32 %v397, %v398
        %v400 = vrot.slane %v399, 4
        %v401 = vadd.f32 %v399, %v400
        %v402 = vrot.slane %v401, 2
        %v403 = vadd.f32 %v401, %v402
        %v404 = vrot.slane %v403, 1
        %v405 = vadd.f32 %v403, %v404
        %v406 = vmul.f32 %v405, 0.0625
        %407 = vst [vmem:[#allocation2 + $0x7] sm:$0x1] %v406
        %v408 = vadd.f32 %v394, %v397
        %v409 = vadd.f32 %v395, %v398
        %s410 = scalar_lea.vmem %s267, 128 [#allocation3]
        %v411 = vld [vmem:[%s410] sm:$0xff]
        %v412 = vld [vmem:[%s410 + $0x8] sm:$0xff]
        %v413 = vadd.f32 %v411, %v412
        %v414 = vrot.slane %v413, 4
        %v415 = vadd.f32 %v413, %v414
        %v416 = vrot.slane %v415, 2
        %v417 = vadd.f32 %v415, %v416
        %v418 = vrot.slane %v417, 1
        %v419 = vadd.f32 %v417, %v418
        %v420 = vmul.f32 %v419, 0.0625
        %421 = vst [vmem:[#allocation2 + $0x8] sm:$0x1] %v420
        %v422 = vadd.f32 %v408, %v411
        %v423 = vadd.f32 %v409, %v412
        %s424 = scalar_lea.vmem %s267, 144 [#allocation3]
        %v425 = vld [vmem:[%s424] sm:$0xff]
        %v426 = vld [vmem:[%s424 + $0x8] sm:$0xff]
        %v427 = vadd.f32 %v425, %v426
        %v428 = vrot.slane %v427, 4
        %v429 = vadd.f32 %v427, %v428
        %v430 = vrot.slane %v429, 2
        %v431 = vadd.f32 %v429, %v430
        %v432 = vrot.slane %v431, 1
        %v433 = vadd.f32 %v431, %v432
        %v434 = vmul.f32 %v433, 0.0625
        %435 = vst [vmem:[#allocation2 + $0x9] sm:$0x1] %v434
        %v436 = vadd.f32 %v422, %v425
        %v437 = vadd.f32 %v423, %v426
        %s438 = scalar_lea.vmem %s267, 160 [#allocation3]
        %v439 = vld [vmem:[%s438] sm:$0xff]
        %v440 = vld [vmem:[%s438 + $0x8] sm:$0xff]
        %v441 = vadd.f32 %v439, %v440
        %v442 = vrot.slane %v441, 4
        %v443 = vadd.f32 %v441, %v442
        %v444 = vrot.slane %v443, 2
        %v445 = vadd.f32 %v443, %v444
        %v446 = vrot.slane %v445, 1
        %v447 = vadd.f32 %v445, %v446
        %v448 = vmul.f32 %v447, 0.0625
        %449 = vst [vmem:[#allocation2 + $0xa] sm:$0x1] %v448
        %v450 = vadd.f32 %v436, %v439
        %v451 = vadd.f32 %v437, %v440
        %s452 = scalar_lea.vmem %s267, 176 [#allocation3]
        %v453 = vld [vmem:[%s452] sm:$0xff]
        %v454 = vld [vmem:[%s452 + $0x8] sm:$0xff]
        %v455 = vadd.f32 %v453, %v454
        %v456 = vrot.slane %v455, 4
        %v457 = vadd.f32 %v455, %v456
        %v458 = vrot.slane %v457, 2
        %v459 = vadd.f32 %v457, %v458
        %v460 = vrot.slane %v459, 1
        %v461 = vadd.f32 %v459, %v460
        %v462 = vmul.f32 %v461, 0.0625
        %463 = vst [vmem:[#allocation2 + $0xb] sm:$0x1] %v462
        %v464 = vadd.f32 %v450, %v453
        %v465 = vadd.f32 %v451, %v454
        %s466 = scalar_lea.vmem %s267, 192 [#allocation3]
        %v467 = vld [vmem:[%s466] sm:$0xff]
        %v468 = vld [vmem:[%s466 + $0x8] sm:$0xff]
        %v469 = vadd.f32 %v467, %v468
        %v470 = vrot.slane %v469, 4
        %v471 = vadd.f32 %v469, %v470
        %v472 = vrot.slane %v471, 2
        %v473 = vadd.f32 %v471, %v472
        %v474 = vrot.slane %v473, 1
        %v475 = vadd.f32 %v473, %v474
        %v476 = vmul.f32 %v475, 0.0625
        %477 = vst [vmem:[#allocation2 + $0xc] sm:$0x1] %v476
        %v478 = vadd.f32 %v464, %v467
        %v479 = vadd.f32 %v465, %v468
        %s480 = scalar_lea.vmem %s267, 208 [#allocation3]
        %v481 = vld [vmem:[%s480] sm:$0xff]
        %v482 = vld [vmem:[%s480 + $0x8] sm:$0xff]
        %v483 = vadd.f32 %v481, %v482
        %v484 = vrot.slane %v483, 4
        %v485 = vadd.f32 %v483, %v484
        %v486 = vrot.slane %v485, 2
        %v487 = vadd.f32 %v485, %v486
        %v488 = vrot.slane %v487, 1
        %v489 = vadd.f32 %v487, %v488
        %v490 = vmul.f32 %v489, 0.0625
        %491 = vst [vmem:[#allocation2 + $0xd] sm:$0x1] %v490
        %v492 = vadd.f32 %v478, %v481
        %v493 = vadd.f32 %v479, %v482
        %s494 = scalar_lea.vmem %s267, 224 [#allocation3]
        %v495 = vld [vmem:[%s494] sm:$0xff]
        %v496 = vld [vmem:[%s494 + $0x8] sm:$0xff]
        %v497 = vadd.f32 %v495, %v496
        %v498 = vrot.slane %v497, 4
        %v499 = vadd.f32 %v497, %v498
        %v500 = vrot.slane %v499, 2
        %v501 = vadd.f32 %v499, %v500
        %v502 = vrot.slane %v501, 1
        %v503 = vadd.f32 %v501, %v502
        %v504 = vmul.f32 %v503, 0.0625
        %505 = vst [vmem:[#allocation2 + $0xe] sm:$0x1] %v504
        %v506 = vadd.f32 %v492, %v495
        %v507 = vadd.f32 %v493, %v496
        %s508 = scalar_lea.vmem %s267, 240 [#allocation3]
        %v509 = vld [vmem:[%s508] sm:$0xff]
        %v510 = vld [vmem:[%s508 + $0x8] sm:$0xff]
        %v511 = vadd.f32 %v509, %v510
        %v512 = vrot.slane %v511, 4
        %v513 = vadd.f32 %v511, %v512
        %v514 = vrot.slane %v513, 2
        %v515 = vadd.f32 %v513, %v514
        %v516 = vrot.slane %v515, 1
        %v517 = vadd.f32 %v515, %v516
        %v518 = vmul.f32 %v517, 0.0625
        %519 = vst [vmem:[#allocation2 + $0xf] sm:$0x1] %v518
        %v520 = vadd.f32 %v506, %v509
        %v521 = vadd.f32 %v507, %v510
        %v522 = vld [vmem:[#allocation2] sm:$0xff]
        %v523 = vld [vmem:[#allocation2 + $0x8] sm:$0xff]
        %v524 = vmul.f32 %v520, 0.0625
        %v525 = vmul.f32 %v521, 0.0625
        %v526 = vld [vmem:[%s1] sm:$0xff]
        %v527 = vld [vmem:[%s1 + $0x8] sm:$0xff]
        %v528 = vld [vmem:[%s1 + $0x10] sm:$0xff]
        %v529 = vld [vmem:[%s1 + $0x18] sm:$0xff]
        %v530 = vld [vmem:[%s1 + $0x20] sm:$0xff]
        %v531 = vld [vmem:[%s1 + $0x28] sm:$0xff]
        %v532 = vld [vmem:[%s1 + $0x30] sm:$0xff]
        %v533 = vld [vmem:[%s1 + $0x38] sm:$0xff]
        %v534 = vld [vmem:[%s1 + $0x40] sm:$0xff]
        %v535 = vld [vmem:[%s1 + $0x48] sm:$0xff]
        %v536 = vld [vmem:[%s1 + $0x50] sm:$0xff]
        %v537 = vld [vmem:[%s1 + $0x58] sm:$0xff]
        %v538 = vld [vmem:[%s1 + $0x60] sm:$0xff]
        %v539 = vld [vmem:[%s1 + $0x68] sm:$0xff]
        %v540 = vld [vmem:[%s1 + $0x70] sm:$0xff]
        %v541 = vld [vmem:[%s1 + $0x78] sm:$0xff]
        %v542 = vld [vmem:[%s2] sm:$0x1]
        %v544 = vperm.slane %v542, 0
        %546 = vmatpush.msra.mxu0 %v541
        %547 = vmatpush.msra.mxu0 %v540
        %548 = vmatpush.msra.mxu0 %v539
        %549 = vmatpush.msra.mxu0 %v538
        %550 = vmatpush.msra.mxu0 %v537
        %551 = vmatpush.msra.mxu0 %v536
        %552 = vmatpush.msra.mxu0 %v535
        %553 = vmatpush.msra.mxu0 %v534
        %554 = vmatpush.msra.mxu0 %v533
        %555 = vmatpush.msra.mxu0 %v532
        %556 = vmatpush.msra.mxu0 %v531
        %557 = vmatpush.msra.mxu0 %v530
        %558 = vmatpush.msra.mxu0 %v529
        %559 = vmatpush.msra.mxu0 %v528
        %560 = vmatpush.msra.mxu0 %v527
        %561 = vmatpush.msra.mxu0 %v526
        %562 = vmatmul.f32.gmra.mxu0 %v522
        %v563 = vpop.f32.mrf.mxu0
        %v564 = vadd.f32 %v544, %v563
        %565 = vmatmul.f32.gmra.mxu0 %v523
        %v566 = vpop.f32.mrf.mxu0
        %v567 = vadd.f32 %v544, %v566
        %568 = vdwg.mxu0
        %v569 = vadd.f32 %v564, 3.0
        %v570 = vadd.f32 %v567, 3.0
        %v571 = vmax.f32 %v569, 0.0
        %v572 = vmax.f32 %v570, 0.0
        %v573 = vmin.f32 %v571, 6.0
        %v574 = vmin.f32 %v572, 6.0
        %v575 = vmul.f32 %v573, 0.16666667
        %v576 = vmul.f32 %v574, 0.16666667
        %v577 = vmul.f32 %v564, %v575
        %v578 = vmul.f32 %v567, %v576
        %v579 = vld [vmem:[%s3] sm:$0xff]
        %v580 = vld [vmem:[%s4] sm:$0x1]
        %v582 = vperm.slane %v580, 0
        %vm584 = vcmask 64512
        %v586 = vsel %vm584, %v577, 0
        %v589 = vsel %vm584, %v578, 0
        %591 = vmatpush.msra.mxu0 0.0
        %592 = vmatpush.msra.mxu0 0.0
        %593 = vmatpush.msra.mxu0 0.0
        %594 = vmatpush.msra.mxu0 0.0
        %595 = vmatpush.msra.mxu0 0.0
        %596 = vmatpush.msra.mxu0 0.0
        %597 = vmatpush.msra.mxu0 0.0
        %598 = vmatpush.msra.mxu0 0.0
        %599 = vmatpush.msra.mxu0 0.0
        %600 = vmatpush.msra.mxu0 0.0
        %601 = vmatpush.msra.mxu0 0.0
        %602 = vmatpush.msra.mxu0 0.0
        %603 = vmatpush.msra.mxu0 0.0
        %604 = vmatpush.msra.mxu0 0.0
        %605 = vmatpush.msra.mxu0 0.0
        %606 = vmatpush.msra.mxu0 %v579
        %607 = vmatmul.f32.gmra.mxu0 %v586
        %v608 = vpop.f32.mrf.mxu0
        %v609 = vadd.f32 %v582, %v608
        %610 = vmatmul.f32.gmra.mxu0 %v589
        %v611 = vpop.f32.mrf.mxu0
        %v612 = vadd.f32 %v582, %v611
        %613 = vdwg.mxu0
        %v614 = vmul.f32 %v609, 0.5
        %v615 = vmul.f32 %v612, 0.5
        %v616 = vtanh.pop %v614
        %v617 = vtanh.pop %v615
        %v618 = vmul.f32 %v616, 0.5
        %v619 = vmul.f32 %v617, 0.5
        %v620 = vadd.f32 %v618, 0.5
        %v621 = vadd.f32 %v619, 0.5
        %622 = vmatpush.msra.mxu0 %v541
        %623 = vmatpush.msra.mxu0 %v540
        %624 = vmatpush.msra.mxu0 %v539
        %625 = vmatpush.msra.mxu0 %v538
        %626 = vmatpush.msra.mxu0 %v537
        %627 = vmatpush.msra.mxu0 %v536
        %628 = vmatpush.msra.mxu0 %v535
        %629 = vmatpush.msra.mxu0 %v534
        %630 = vmatpush.msra.mxu0 %v533
        %631 = vmatpush.msra.mxu0 %v532
        %632 = vmatpush.msra.mxu0 %v531
        %633 = vmatpush.msra.mxu0 %v530
        %634 = vmatpush.msra.mxu0 %v529
        %635 = vmatpush.msra.mxu0 %v528
        %636 = vmatpush.msra.mxu0 %v527
        %637 = vmatpush.msra.mxu0 %v526
        %638 = vmatmul.f32.gmra.mxu0 %v524
        %v639 = vpop.f32.mrf.mxu0
        %v640 = vadd.f32 %v544, %v639
        %641 = vmatmul.f32.gmra.mxu0 %v525
        %v642 = vpop.f32.mrf.mxu0
        %v643 = vadd.f32 %v544, %v642
        %644 = vdwg.mxu0
        %v645 = vadd.f32 %v640, 3.0
        %v646 = vadd.f32 %v643, 3.0
        %v647 = vmax.f32 %v645, 0.0
        %v648 = vmax.f32 %v646, 0.0
        %v649 = vmin.f32 %v647, 6.0
        %v650 = vmin.f32 %v648, 6.0
        %v651 = vmul.f32 %v649, 0.16666667
        %v652 = vmul.f32 %v650, 0.16666667
        %v653 = vmul.f32 %v640, %v651
        %v654 = vmul.f32 %v643, %v652
        %v655 = vld [vmem:[%s5] sm:$0xff]
        %v656 = vld [vmem:[%s6] sm:$0x1]
        %v658 = vperm.slane %v656, 0
        %v661 = vsel %vm584, %v653, 0
        %v664 = vsel %vm584, %v654, 0
        %666 = vmatpush.msra.mxu0 0.0
        %667 = vmatpush.msra.mxu0 0.0
        %668 = vmatpush.msra.mxu0 0.0
        %669 = vmatpush.msra.mxu0 0.0
        %670 = vmatpush.msra.mxu0 0.0
        %671 = vmatpush.msra.mxu0 0.0
        %672 = vmatpush.msra.mxu0 0.0
        %673 = vmatpush.msra.mxu0 0.0
        %674 = vmatpush.msra.mxu0 0.0
        %675 = vmatpush.msra.mxu0 0.0
        %676 = vmatpush.msra.mxu0 0.0
        %677 = vmatpush.msra.mxu0 0.0
        %678 = vmatpush.msra.mxu0 0.0
        %679 = vmatpush.msra.mxu0 0.0
        %680 = vmatpush.msra.mxu0 0.0
        %681 = vmatpush.msra.mxu0 %v655
        %682 = vmatmul.f32.gmra.mxu0 %v661
        %v683 = vpop.f32.mrf.mxu0
        %v684 = vadd.f32 %v658, %v683
        %685 = vmatmul.f32.gmra.mxu0 %v664
        %v686 = vpop.f32.mrf.mxu0
        %v687 = vadd.f32 %v658, %v686
        %688 = vdwg.mxu0
        %v689 = vmul.f32 %v684, 0.5
        %v690 = vmul.f32 %v687, 0.5
        %v691 = vtanh.pop %v689
        %v692 = vtanh.pop %v690
        %v693 = vmul.f32 %v691, 0.5
        %v694 = vmul.f32 %v692, 0.5
        %v695 = vadd.f32 %v693, 0.5
        %v696 = vadd.f32 %v694, 0.5
        %v697 = vld [vmem:[%s267] sm:$0xff]
        %v698 = vld [vmem:[%s267 + $0x8] sm:$0xff]
        %v699 = vld [vmem:[%s267 + $0x10] sm:$0xff]
        %v700 = vld [vmem:[%s267 + $0x18] sm:$0xff]
        %v701 = vld [vmem:[%s267 + $0x20] sm:$0xff]
        %v702 = vld [vmem:[%s267 + $0x28] sm:$0xff]
        %v703 = vld [vmem:[%s267 + $0x30] sm:$0xff]
        %v704 = vld [vmem:[%s267 + $0x38] sm:$0xff]
        %v705 = vld [vmem:[%s267 + $0x40] sm:$0xff]
        %v706 = vld [vmem:[%s267 + $0x48] sm:$0xff]
        %v707 = vld [vmem:[%s267 + $0x50] sm:$0xff]
        %v708 = vld [vmem:[%s267 + $0x58] sm:$0xff]
        %v709 = vld [vmem:[%s267 + $0x60] sm:$0xff]
        %v710 = vld [vmem:[%s267 + $0x68] sm:$0xff]
        %v711 = vld [vmem:[%s267 + $0x70] sm:$0xff]
        %v712 = vld [vmem:[%s267 + $0x78] sm:$0xff]
        %v713 = vld [vmem:[%s267 + $0x80] sm:$0xff]
        %v714 = vld [vmem:[%s267 + $0x88] sm:$0xff]
        %v715 = vld [vmem:[%s267 + $0x90] sm:$0xff]
        %v716 = vld [vmem:[%s267 + $0x98] sm:$0xff]
        %v717 = vld [vmem:[%s267 + $0xa0] sm:$0xff]
        %v718 = vld [vmem:[%s267 + $0xa8] sm:$0xff]
        %v719 = vld [vmem:[%s267 + $0xb0] sm:$0xff]
        %v720 = vld [vmem:[%s267 + $0xb8] sm:$0xff]
        %v721 = vld [vmem:[%s267 + $0xc0] sm:$0xff]
        %v722 = vld [vmem:[%s267 + $0xc8] sm:$0xff]
        %v723 = vld [vmem:[%s267 + $0xd0] sm:$0xff]
        %v724 = vld [vmem:[%s267 + $0xd8] sm:$0xff]
        %v725 = vld [vmem:[%s267 + $0xe0] sm:$0xff]
        %v726 = vld [vmem:[%s267 + $0xe8] sm:$0xff]
        %v727 = vld [vmem:[%s267 + $0xf0] sm:$0xff]
        %v728 = vld [vmem:[%s267 + $0xf8] sm:$0xff]
        %v731 = vrot.slane %v620, 1
        %v732 = vrot.slane %v620, 2
        %v733 = vrot.slane %v620, 3
        %v734 = vrot.slane %v620, 4
        %v735 = vrot.slane %v620, 5
        %v736 = vrot.slane %v620, 6
        %v737 = vrot.slane %v620, 7
        %v738 = vrot.slane %v621, 1
        %v739 = vrot.slane %v621, 2
        %v740 = vrot.slane %v621, 3
        %v741 = vrot.slane %v621, 4
        %v742 = vrot.slane %v621, 5
        %v743 = vrot.slane %v621, 6
        %v744 = vrot.slane %v621, 7
        %v745 = vperm.slane %v620, 0
        %v746 = vperm.slane %v731, 0
        %v747 = vperm.slane %v732, 0
        %v748 = vperm.slane %v733, 0
        %v749 = vperm.slane %v734, 0
        %v750 = vperm.slane %v735, 0
        %v751 = vperm.slane %v736, 0
        %v752 = vperm.slane %v737, 0
        %v753 = vperm.slane %v621, 0
        %v754 = vperm.slane %v738, 0
        %v755 = vperm.slane %v739, 0
        %v756 = vperm.slane %v740, 0
        %v757 = vperm.slane %v741, 0
        %v758 = vperm.slane %v742, 0
        %v759 = vperm.slane %v743, 0
        %v760 = vperm.slane %v744, 0
        %v777 = vmul.f32 %v697, %v745
        %v778 = vmul.f32 %v698, %v745
        %v779 = vmul.f32 %v699, %v746
        %v780 = vmul.f32 %v700, %v746
        %v781 = vmul.f32 %v701, %v747
        %v782 = vmul.f32 %v702, %v747
        %v783 = vmul.f32 %v703, %v748
        %v784 = vmul.f32 %v704, %v748
        %v785 = vmul.f32 %v705, %v749
        %v786 = vmul.f32 %v706, %v749
        %v787 = vmul.f32 %v707, %v750
        %v788 = vmul.f32 %v708, %v750
        %v789 = vmul.f32 %v709, %v751
        %v790 = vmul.f32 %v710, %v751
        %v791 = vmul.f32 %v711, %v752
        %v792 = vmul.f32 %v712, %v752
        %v793 = vmul.f32 %v713, %v753
        %v794 = vmul.f32 %v714, %v753
        %v795 = vmul.f32 %v715, %v754
        %v796 = vmul.f32 %v716, %v754
        %v797 = vmul.f32 %v717, %v755
        %v798 = vmul.f32 %v718, %v755
        %v799 = vmul.f32 %v719, %v756
        %v800 = vmul.f32 %v720, %v756
        %v801 = vmul.f32 %v721, %v757
        %v802 = vmul.f32 %v722, %v757
        %v803 = vmul.f32 %v723, %v758
        %v804 = vmul.f32 %v724, %v758
        %v805 = vmul.f32 %v725, %v759
        %v806 = vmul.f32 %v726, %v759
        %v807 = vmul.f32 %v727, %v760
        %v808 = vmul.f32 %v728, %v760
        %v809 = vmul.f32 %v777, %v695
        %v810 = vmul.f32 %v778, %v696
        %v811 = vmul.f32 %v779, %v695
        %v812 = vmul.f32 %v780, %v696
        %v813 = vmul.f32 %v781, %v695
        %v814 = vmul.f32 %v782, %v696
        %v815 = vmul.f32 %v783, %v695
        %v816 = vmul.f32 %v784, %v696
        %v817 = vmul.f32 %v785, %v695
        %v818 = vmul.f32 %v786, %v696
        %v819 = vmul.f32 %v787, %v695
        %v820 = vmul.f32 %v788, %v696
        %v821 = vmul.f32 %v789, %v695
        %v822 = vmul.f32 %v790, %v696
        %v823 = vmul.f32 %v791, %v695
        %v824 = vmul.f32 %v792, %v696
        %v825 = vmul.f32 %v793, %v695
        %v826 = vmul.f32 %v794, %v696
        %v827 = vmul.f32 %v795, %v695
        %v828 = vmul.f32 %v796, %v696
        %v829 = vmul.f32 %v797, %v695
        %v830 = vmul.f32 %v798, %v696
        %v831 = vmul.f32 %v799, %v695
        %v832 = vmul.f32 %v800, %v696
        %v833 = vmul.f32 %v801, %v695
        %v834 = vmul.f32 %v802, %v696
        %v835 = vmul.f32 %v803, %v695
        %v836 = vmul.f32 %v804, %v696
        %v837 = vmul.f32 %v805, %v695
        %v838 = vmul.f32 %v806, %v696
        %v839 = vmul.f32 %v807, %v695
        %v840 = vmul.f32 %v808, %v696
        %841 = vst [vmem:[%s298] sm:$0xff] %v809
        %842 = vst [vmem:[%s298 + $0x8] sm:$0xff] %v810
        %843 = vst [vmem:[%s298 + $0x10] sm:$0xff] %v811
        %844 = vst [vmem:[%s298 + $0x18] sm:$0xff] %v812
        %845 = vst [vmem:[%s298 + $0x20] sm:$0xff] %v813
        %846 = vst [vmem:[%s298 + $0x28] sm:$0xff] %v814
        %847 = vst [vmem:[%s298 + $0x30] sm:$0xff] %v815
        %848 = vst [vmem:[%s298 + $0x38] sm:$0xff] %v816
        %849 = vst [vmem:[%s298 + $0x40] sm:$0xff] %v817
        %850 = vst [vmem:[%s298 + $0x48] sm:$0xff] %v818
        %851 = vst [vmem:[%s298 + $0x50] sm:$0xff] %v819
        %852 = vst [vmem:[%s298 + $0x58] sm:$0xff] %v820
        %853 = vst [vmem:[%s298 + $0x60] sm:$0xff] %v821
        %854 = vst [vmem:[%s298 + $0x68] sm:$0xff] %v822
        %855 = vst [vmem:[%s298 + $0x70] sm:$0xff] %v823
        %856 = vst [vmem:[%s298 + $0x78] sm:$0xff] %v824
        %857 = vst [vmem:[%s298 + $0x80] sm:$0xff] %v825
        %858 = vst [vmem:[%s298 + $0x88] sm:$0xff] %v826
        %859 = vst [vmem:[%s298 + $0x90] sm:$0xff] %v827
        %860 = vst [vmem:[%s298 + $0x98] sm:$0xff] %v828
        %861 = vst [vmem:[%s298 + $0xa0] sm:$0xff] %v829
        %862 = vst [vmem:[%s298 + $0xa8] sm:$0xff] %v830
        %863 = vst [vmem:[%s298 + $0xb0] sm:$0xff] %v831
        %864 = vst [vmem:[%s298 + $0xb8] sm:$0xff] %v832
        %865 = vst [vmem:[%s298 + $0xc0] sm:$0xff] %v833
        %866 = vst [vmem:[%s298 + $0xc8] sm:$0xff] %v834
        %867 = vst [vmem:[%s298 + $0xd0] sm:$0xff] %v835
        %868 = vst [vmem:[%s298 + $0xd8] sm:$0xff] %v836
        %869 = vst [vmem:[%s298 + $0xe0] sm:$0xff] %v837
        %870 = vst [vmem:[%s298 + $0xe8] sm:$0xff] %v838
        %871 = vst [vmem:[%s298 + $0xf0] sm:$0xff] %v839
        %872 = vst [vmem:[%s298 + $0xf8] sm:$0xff] %v840
        %s873 = sand.u32 %s184, 1
        %s874 = scalar_lea.sflag [#allocation5], %s873
        %s875 = sand.u32 %s184, 1
        %s876 = smul.addr %s875, 256
        %s877 = scalar_lea.vmem [#allocation6], %s876
        // Predicated region
        $region53: #{coord_att_forward.1} parent=47 // pred_check
          %p878 = pneg %p194
        $region54: #{coord_att_forward.1} parent=47 // pred_check_branch
          %880 = sbr.rel (%p878) target = $region56
        $region55: #{coord_att_forward.1} parent=47 // pred_region
          %882 = vsyncadd %s874, 0
          %s883 = smul.addr %s24, 32
          %s884 = smul.addr %s883, 8
          %s885 = scalar_lea.hbm %s7, %s884
          %s886 = sshll.u32 %s877, 4
          %s887 = int_to_ptr.vmem [resolvable:$true] %s886
          %s888 = sshll.u32 %s885, 4
          %s889 = int_to_ptr.hbm [resolvable:$true] %s888
          %894 = dma.vmem_to_hbm [thread:$0]  %s887, 4096, %s889, %s874, 128, 128, 8
        $region56: #{coord_att_forward.1} parent=47 // pred_fallthru
          _
      $region48: #{coord_att_forward.1} parent=5 // pred_fallthru
        _
      %p895 = scmp.le.s32.totalorder 2, %s19
      // Predicated region
      $region57: #{coord_att_forward.1} parent=5 // pred_check
        %p896 = pneg %p895
      $region58: #{coord_att_forward.1} parent=5 // pred_check_branch
        %898 = sbr.rel (%p896) target = $region60
      $region59: #{coord_att_forward.1} parent=5 // pred_region
        %s899 = ssub.s32 %s19, 2
        // Predicated region
        $region61: #{coord_att_forward.1} parent=59 // pred_check
          %p900 = pneg %p200
        $region62: #{coord_att_forward.1} parent=59 // pred_check_branch
          %902 = sbr.rel (%p900) target = $region64
        $region63: #{coord_att_forward.1} parent=59 // pred_region
          %s903 = sand.u32 %s185, 1
          %s904 = scalar_lea.sflag [#allocation5], %s903
          %s905 = sand.u32 %s185, 1
          %s906 = smul.addr %s905, 256
          %s907 = scalar_lea.vmem [#allocation6], %s906
          %909 = dma.done %s904, 4096
        $region64: #{coord_att_forward.1} parent=59 // pred_fallthru
          _
      $region60: #{coord_att_forward.1} parent=5 // pred_fallthru
        _
    $region6: #{coord_att_forward.1} parent=1 // loop_footer
      %s23 = sadd.s32 1, %s19
    $region7: #{coord_att_forward.1} parent=1 // loop_footer_branch
      %18 = sbr.rel target = $region3
    $region8: #{coord_att_forward.1} parent=1 // loop_exit
      _
    %910 = vsyncpa [#allocation4], 1
    %s911 = scalar_lea.sflag [#allocation4], 1
    %912 = vsyncpa %s911, 1
    %913 = vsyncpa [#allocation5], 1
    %s914 = scalar_lea.sflag [#allocation5], 1
    %915 = vsyncpa %s914, 1

</llo_original>
